<compile_context>
chip_gen: v5e
topology: v5e:2x2
jax: 0.10.0
libtpu: 0.0.40
codegen_flags: <defaults>
</compile_context>

<pallas_src>
import jax
import jax.numpy as jnp
import numpy as np
from jax.experimental import pallas as pl
from jax.experimental.pallas import tpu as pltpu


def _rup(x, m):
    return -(-x // m) * m


class Config:
    title_dim = 4            # input channels of titles
    n_filters = 8
    filter_sz = 3
    pool_sz = 3
    p_drop = 0.5             # dropout is identity at inference
    num_conv = 1
    input_dim_1 = 8          # == n_filters (LSTM1 input dim)
    n_hidden_LSTM_titles = 16
    input_dim_2 = 7          # tech indicator dim (LSTM2 input dim)
    n_hidden_LSTM_tech = 16
    n_outputs = 2


# --------------------------------------------------------------------------
# Parameter packing: every weight at an 8-aligned row offset in ONE buffer.
# --------------------------------------------------------------------------
def _param_layout(cfg):
    k, Cin, F = cfg.filter_sz, cfg.title_dim, cfg.n_filters
    H1, H2 = cfg.n_hidden_LSTM_titles, cfg.n_hidden_LSTM_tech
    D1, D2 = cfg.input_dim_1, cfg.input_dim_2
    entries = []
    for j in range(k):
        entries.append((f"c1w{j}", (Cin, F)))               # conv1 tap j
    entries.append(("c1b", (1, F)))
    for ci in range(cfg.num_conv):
        for j in range(k):
            entries.append((f"cN{ci}w{j}", (F, F)))         # convN tap j
        entries.append((f"cN{ci}b", (1, F)))
    entries += [("l1wih", (D1, 4 * H1)), ("l1whh", (H1, 4 * H1)), ("l1b", (1, 4 * H1)),
                ("l2wih", (D2, 4 * H2)), ("l2whh", (H2, 4 * H2)), ("l2b", (1, 4 * H2)),
                ("ow", (2 * (H1 + H2), cfg.n_outputs)), ("ob", (1, cfg.n_outputs))]
    offs, row = {}, 0
    for name, shp in entries:
        offs[name] = row
        row += _rup(shp[0], 8)
    lanes = _rup(max(s[1] for _, s in entries), 128)
    return entries, offs, _rup(row, 8), lanes


def pack_params(params, cfg):
    """One-time host-side packing of all weights into a single (R, 128) buffer."""
    k, Cin, F = cfg.filter_sz, cfg.title_dim, cfg.n_filters
    entries, offs, rows, lanes = _param_layout(cfg)
    vals = {"c1b": params["conv1_b"],
            "l1wih": params["lstm1_wih"], "l1whh": params["lstm1_whh"],
            "l1b": params["lstm1_b"],
            "l2wih": params["lstm2_wih"], "l2whh": params["lstm2_whh"],
            "l2b": params["lstm2_b"],
            "ow": params["out_w"], "ob": params["out_b"]}
    for j in range(k):
        vals[f"c1w{j}"] = params["conv1_w"][j * Cin:(j + 1) * Cin, :]
    for ci in range(cfg.num_conv):
        for j in range(k):
            vals[f"cN{ci}w{j}"] = params["convN_w"][ci, j * F:(j + 1) * F, :]
        vals[f"cN{ci}b"] = params["convN_b"][ci]
    buf = np.zeros((rows, lanes), np.float32)
    for name, shp in entries:
        a = np.asarray(vals[name], np.float32)
        assert a.shape == tuple(shp), (name, a.shape, shp)
        r = offs[name]
        buf[r:r + shp[0], :shp[1]] = a
    return jnp.asarray(buf)


# --------------------------------------------------------------------------
# The fused kernel.
# --------------------------------------------------------------------------
def _make_kernel(cfg, B, L, T2, offs, x_rows):
    Cin, F, k, P = cfg.title_dim, cfg.n_filters, cfg.filter_sz, cfg.pool_sz
    NC = cfg.num_conv
    D1, H1 = cfg.input_dim_1, cfg.n_hidden_LSTM_titles
    D2, H2 = cfg.input_dim_2, cfg.n_hidden_LSTM_tech
    nOut = cfg.n_outputs
    assert D1 == F, "config.input_dim_1 must equal config.n_filters"
    assert P == 3, "kernel specializes MaxPool1d(3, stride=1, padding=1)"
    assert NC == 0 or k == 3, "padded inner convs specialize filter_sz=3"
    L1 = L - k + 1                       # Conv1d(title_dim, F, k), no padding
    assert L1 >= 1
    n1 = L1 * B                          # rows of every conv/pool slab (time-major)

    def pool_relu(h):
        """MaxPool1d(3, stride=1, padding=1) + ReLU on a time-major (T*B, F)
        slab.  Edges handled by duplicating the first/last position block
        (max(x, x) = x), so no -inf and no masks enter the datapath."""
        n = h.shape[0]
        prev = jnp.concatenate([h[0:B, :], h[0:n - B, :]], axis=0)    # pos i-1
        nxt = jnp.concatenate([h[B:n, :], h[n - B:n, :]], axis=0)     # pos i+1
        return jnp.maximum(jnp.maximum(h, jnp.maximum(prev, nxt)), 0.0)

    def lstm(x_tm, wih, whh, bias, H):
        """Single-layer LSTM (gate order i,f,g,o, zero init).  x_tm is the
        time-major (T*B, D) slab; its projection (+bias) is one matmul off the
        serial chain; each step reads a contiguous (B, 4H) row block and
        activates the full gate slab once before slicing."""
        T = x_tm.shape[0] // B
        xp = jnp.dot(x_tm, wih, preferred_element_type=jnp.float32) + bias
        h = jnp.zeros((B, H), jnp.float32)
        c = jnp.zeros((B, H), jnp.float32)
        for t in range(T):                                   # fully unrolled
            g = xp[t * B:(t + 1) * B, :] + jnp.dot(
                h, whh, preferred_element_type=jnp.float32)  # (B, 4H)
            sg = jax.nn.sigmoid(g)                           # i, f, o in one pass
            tg = jnp.tanh(g)                                 # g in one pass
            c = sg[:, H:2 * H] * c + sg[:, 0:H] * tg[:, 2 * H:3 * H]
            h = sg[:, 3 * H:4 * H] * jnp.tanh(c)
        return h, c

    def kernel(data_ref, par_ref, o_ref):
        def pload(name, rows, cols):
            r = offs[name]
            return par_ref[r:r + rows, 0:cols]

        # ---------- conv1 (valid) as a sum of k shifted matmuls -------------
        x = data_ref[0:L * B, 0:Cin]                  # (L*B, Cin) time-major
        acc = jnp.dot(x[0:n1, :], pload("c1w0", Cin, F),
                      preferred_element_type=jnp.float32)
        for j in range(1, k):
            acc = acc + jnp.dot(x[j * B:j * B + n1, :], pload(f"c1w{j}", Cin, F),
                                preferred_element_type=jnp.float32)
        h = pool_relu(acc + pload("c1b", 1, F))       # dropout: identity (eval)

        # ---------- num_conv x [Conv1d(F,F,3,pad=1) + pool + relu] ----------
        for ci in range(NC):
            zb = jnp.zeros((B, F), jnp.float32)
            prev = jnp.concatenate([zb, h[0:n1 - B, :]], axis=0)   # in[i-1], 0-pad
            nxt = jnp.concatenate([h[B:n1, :], zb], axis=0)        # in[i+1], 0-pad
            acc = (jnp.dot(prev, pload(f"cN{ci}w0", F, F),
                           preferred_element_type=jnp.float32)
                   + jnp.dot(h, pload(f"cN{ci}w1", F, F),
                             preferred_element_type=jnp.float32)
                   + jnp.dot(nxt, pload(f"cN{ci}w2", F, F),
                             preferred_element_type=jnp.float32))
            h = pool_relu(acc + pload(f"cN{ci}b", 1, F))  # dropout: identity

        # ---------- LSTM1 over conv features (already time-major) ------------
        h1, c1 = lstm(h, pload("l1wih", D1, 4 * H1), pload("l1whh", H1, 4 * H1),
                      pload("l1b", 1, 4 * H1), H1)

        # ---------- LSTM2 over tech indicators -------------------------------
        tech = data_ref[x_rows:x_rows + T2 * B, 0:D2]    # (T2*B, D2) time-major
        h2, c2 = lstm(tech, pload("l2wih", D2, 4 * H2), pload("l2whh", H2, 4 * H2),
                      pload("l2b", 1, 4 * H2), H2)

        # ---------- head: Linear + LogSoftmax(dim=1) --------------------------
        # feats = [h1|c1|h2|c2]; the lane-concat is replaced by 4 small matmuls
        # against the corresponding row blocks of out_w.
        r = offs["ow"]
        logits = (jnp.dot(h1, par_ref[r:r + H1, 0:nOut],
                          preferred_element_type=jnp.float32)
                  + jnp.dot(c1, par_ref[r + H1:r + 2 * H1, 0:nOut],
                            preferred_element_type=jnp.float32)
                  + jnp.dot(h2, par_ref[r + 2 * H1:r + 2 * H1 + H2, 0:nOut],
                            preferred_element_type=jnp.float32)
                  + jnp.dot(c2, par_ref[r + 2 * H1 + H2:r + 2 * H1 + 2 * H2, 0:nOut],
                            preferred_element_type=jnp.float32)
                  + pload("ob", 1, nOut))
        m = jnp.max(logits, axis=1, keepdims=True)
        z = logits - m
        o_ref[...] = z - jnp.log(jnp.sum(jnp.exp(z), axis=1, keepdims=True))

    return kernel


def build_rcnn_forward(cfg, B, L, T2):
    """Returns forward(param_buf, titles, tech) -> (B, n_outputs) log-probs."""
    Cin, D2 = cfg.title_dim, cfg.input_dim_2
    _, offs, _, _ = _param_layout(cfg)
    x_rows = _rup(L * B, 8)
    d_rows = x_rows + _rup(T2 * B, 8)
    d_lanes = _rup(max(Cin, D2), 8)
    kernel = _make_kernel(cfg, B, L, T2, offs, x_rows)
    vmem = pl.BlockSpec(memory_space=pltpu.MemorySpace.VMEM)

    @jax.jit
    def forward(param_buf, titles, tech_indicators):
        # titles (B, title_dim, L) NCL; tech (B, T2, input_dim_2).
        # Repacked time-major into ONE small buffer -> 2 input DMAs total.
        x_tm = jnp.transpose(titles.astype(jnp.float32), (2, 0, 1)).reshape(L * B, Cin)
        t_tm = jnp.transpose(tech_indicators.astype(jnp.float32),
                             (1, 0, 2)).reshape(T2 * B, D2)
        data = jnp.zeros((d_rows, d_lanes), jnp.float32)
        data = data.at[0:L * B, 0:Cin].set(x_tm)
        data = data.at[x_rows:x_rows + T2 * B, 0:D2].set(t_tm)
        return pl.pallas_call(
            kernel,
            out_shape=jax.ShapeDtypeStruct((B, cfg.n_outputs), jnp.float32),
            in_specs=[vmem, vmem],
            out_specs=vmem,
        )(data, param_buf)

    return forward


# --------------------------------------------------------------------------
# Parameter init (kernel layout, see header) and a pure-JAX reference.
# --------------------------------------------------------------------------
def init_params(cfg, key):
    ks = jax.random.split(key, 12)

    def rnd(kk, shape, scale=0.1):
        return (scale * jax.random.normal(kk, shape)).astype(jnp.float32)

    F, Cin, ksz = cfg.n_filters, cfg.title_dim, cfg.filter_sz
    H1, H2 = cfg.n_hidden_LSTM_titles, cfg.n_hidden_LSTM_tech
    D1, D2 = cfg.input_dim_1, cfg.input_dim_2
    return dict(
        conv1_w=rnd(ks[0], (ksz * Cin, F)),
        conv1_b=rnd(ks[1], (1, F)),
        convN_w=rnd(ks[2], (cfg.num_conv, ksz * F, F)),
        convN_b=rnd(ks[3], (cfg.num_conv, 1, F)),
        lstm1_wih=rnd(ks[4], (D1, 4 * H1)),
        lstm1_whh=rnd(ks[5], (H1, 4 * H1)),
        lstm1_b=rnd(ks[6], (1, 4 * H1)),     # b_ih + b_hh combined
        lstm2_wih=rnd(ks[7], (D2, 4 * H2)),
        lstm2_whh=rnd(ks[8], (H2, 4 * H2)),
        lstm2_b=rnd(ks[9], (1, 4 * H2)),
        out_w=rnd(ks[10], (2 * (H1 + H2), cfg.n_outputs)),
        out_b=rnd(ks[11], (1, cfg.n_outputs)),
    )


def reference_forward(params, titles, tech, cfg):
    """Straightforward jnp implementation of RCNN_base.forward (eval mode)."""
    B, _, L = titles.shape
    k, F, P, NC = cfg.filter_sz, cfg.n_filters, cfg.pool_sz, cfg.num_conv
    H1, H2 = cfg.n_hidden_LSTM_titles, cfg.n_hidden_LSTM_tech
    x = jnp.transpose(titles.astype(jnp.float32), (0, 2, 1))       # (B, L, Cin)

    def conv1d(inp, w, b, pad):          # inp (B, Lc, Ci), w (k*Ci, Co), b (1, Co)
        Ci = inp.shape[2]
        if pad:
            z = jnp.zeros((B, pad, Ci), jnp.float32)
            inp = jnp.concatenate([z, inp, z], axis=1)
        Lout = inp.shape[1] - k + 1
        out = b[None]
        for j in range(k):
            out = out + jnp.einsum("blc,cf->blf", inp[:, j:j + Lout, :],
                                   w[j * Ci:(j + 1) * Ci, :])
        return out

    def pool_relu(inp):                  # MaxPool1d(P, stride=1, padding=1) + ReLU
        Lc, C = inp.shape[1], inp.shape[2]
        neg = jnp.full((B, 1, C), -jnp.inf, jnp.float32)
        p = jnp.concatenate([neg, inp, neg], axis=1)
        Lout = Lc + 2 - P + 1
        m = p[:, 0:Lout, :]
        for j in range(1, P):
            m = jnp.maximum(m, p[:, j:j + Lout, :])
        return jnp.maximum(m, 0.0)

    h = pool_relu(conv1d(x, params["conv1_w"], params["conv1_b"], 0))
    for ci in range(NC):
        h = pool_relu(conv1d(h, params["convN_w"][ci], params["convN_b"][ci], 1))

    def lstm(seq, wih, whh, b, H):       # seq (T, B, D)
        hh = jnp.zeros((B, H), jnp.float32)
        cc = jnp.zeros((B, H), jnp.float32)
        for t in range(seq.shape[0]):
            g = seq[t] @ wih + hh @ whh + b
            i = jax.nn.sigmoid(g[:, 0:H])
            f = jax.nn.sigmoid(g[:, H:2 * H])
            gg = jnp.tanh(g[:, 2 * H:3 * H])
            o = jax.nn.sigmoid(g[:, 3 * H:4 * H])
            cc = f * cc + i * gg
            hh = o * jnp.tanh(cc)
        return hh, cc

    h1, c1 = lstm(jnp.transpose(h, (1, 0, 2)), params["lstm1_wih"],
                  params["lstm1_whh"], params["lstm1_b"], H1)
    h2, c2 = lstm(jnp.transpose(tech.astype(jnp.float32), (1, 0, 2)),
                  params["lstm2_wih"], params["lstm2_whh"], params["lstm2_b"], H2)
    feats = jnp.concatenate([h1, c1, h2, c2], axis=1)
    logits = feats @ params["out_w"] + params["out_b"]
    return jax.nn.log_softmax(logits, axis=1)


if __name__ == "__main__":
    cfg = Config()
    key = jax.random.PRNGKey(0)
    k_titles, k_tech, k_params = jax.random.split(key, 3)

    B, L, T2 = 2, 16, 5
    titles = jax.random.normal(k_titles, (B, cfg.title_dim, L), jnp.float32)
    tech = jax.random.normal(k_tech, (B, T2, cfg.input_dim_2), jnp.float32)
    params = init_params(cfg, k_params)

    param_buf = pack_params(params, cfg)            # one-time host packing
    forward = build_rcnn_forward(cfg, B, L, T2)

    out = jax.block_until_ready(forward(param_buf, titles, tech))

    assert out.shape == (B, cfg.n_outputs), out.shape
    assert bool(jnp.all(jnp.isfinite(out)))
    # log-softmax rows must exponentiate to a probability distribution
    assert jnp.allclose(jnp.sum(jnp.exp(out), axis=1), 1.0, atol=1e-4)

    # numerical check against the plain-JAX reference of the PyTorch module
    ref = reference_forward(params, titles, tech, cfg)
    max_err = float(jnp.max(jnp.abs(out - ref)))
    assert max_err < 5e-3, f"kernel vs reference mismatch: max |diff| = {max_err}"

    print("KERNEL_OK")
</pallas_src>

<mosaic_0001>
module attributes {stable_mosaic.version = 11 : i64} {
  func.func @kernel(%arg0: memref<48x8xf32, #tpu.memory_space<vmem>>, %arg1: memref<200x128xf32, #tpu.memory_space<vmem>>, %arg2: memref<2x2xf32, #tpu.memory_space<vmem>>) attributes {dimension_semantics = [], scalar_prefetch = 0 : i64, scratch_operands = 0 : i64, tpu.core_type = #tpu.core_type<tc>} {
    %c0 = arith.constant 0 : index
    %c0_0 = arith.constant 0 : index
    %0 = vector.load %arg0[%c0, %c0_0] : memref<48x8xf32, #tpu.memory_space<vmem>>, vector<32x4xf32>
    %1 = vector.extract_strided_slice %0 {offsets = [0, 0], sizes = [28, 4], strides = [1, 1]} : vector<32x4xf32> to vector<28x4xf32>
    %c0_1 = arith.constant 0 : index
    %c0_2 = arith.constant 0 : index
    %2 = vector.load %arg1[%c0_1, %c0_2] : memref<200x128xf32, #tpu.memory_space<vmem>>, vector<4x8xf32>
    %cst = arith.constant dense<0.000000e+00> : vector<28x8xf32>
    %3 = tpu.matmul %1, %2, %cst {dimension_numbers = #tpu.dot_dimension_numbers<[1], [0], [0], [1], [0, 0, 1, 1], [], []>} : vector<28x4xf32>, vector<4x8xf32>, vector<28x8xf32> -> vector<28x8xf32>
    %4 = vector.extract_strided_slice %0 {offsets = [2, 0], sizes = [28, 4], strides = [1, 1]} : vector<32x4xf32> to vector<28x4xf32>
    %c8 = arith.constant 8 : index
    %c0_3 = arith.constant 0 : index
    %5 = vector.load %arg1[%c8, %c0_3] : memref<200x128xf32, #tpu.memory_space<vmem>>, vector<4x8xf32>
    %cst_4 = arith.constant dense<0.000000e+00> : vector<28x8xf32>
    %6 = tpu.matmul %4, %5, %cst_4 {dimension_numbers = #tpu.dot_dimension_numbers<[1], [0], [0], [1], [0, 0, 1, 1], [], []>} : vector<28x4xf32>, vector<4x8xf32>, vector<28x8xf32> -> vector<28x8xf32>
    %7 = arith.addf %3, %6 : vector<28x8xf32>
    %8 = vector.extract_strided_slice %0 {offsets = [4, 0], sizes = [28, 4], strides = [1, 1]} : vector<32x4xf32> to vector<28x4xf32>
    %c16 = arith.constant 16 : index
    %c0_5 = arith.constant 0 : index
    %9 = vector.load %arg1[%c16, %c0_5] : memref<200x128xf32, #tpu.memory_space<vmem>>, vector<4x8xf32>
    %cst_6 = arith.constant dense<0.000000e+00> : vector<28x8xf32>
    %10 = tpu.matmul %8, %9, %cst_6 {dimension_numbers = #tpu.dot_dimension_numbers<[1], [0], [0], [1], [0, 0, 1, 1], [], []>} : vector<28x4xf32>, vector<4x8xf32>, vector<28x8xf32> -> vector<28x8xf32>
    %11 = arith.addf %7, %10 : vector<28x8xf32>
    %c24 = arith.constant 24 : index
    %c0_7 = arith.constant 0 : index
    %12 = vector.load %arg1[%c24, %c0_7] : memref<200x128xf32, #tpu.memory_space<vmem>>, vector<1x8xf32>
    %13 = vector.broadcast %12 : vector<1x8xf32> to vector<28x8xf32>
    %14 = arith.addf %11, %13 : vector<28x8xf32>
    %15 = vector.extract_strided_slice %14 {offsets = [0, 0], sizes = [2, 8], strides = [1, 1]} : vector<28x8xf32> to vector<2x8xf32>
    %16 = vector.extract_strided_slice %14 {offsets = [0, 0], sizes = [26, 8], strides = [1, 1]} : vector<28x8xf32> to vector<26x8xf32>
    %17 = tpu.concatenate %15, %16 in 0 : vector<2x8xf32>, vector<26x8xf32> -> vector<28x8xf32>
    %18 = vector.extract_strided_slice %14 {offsets = [2, 0], sizes = [26, 8], strides = [1, 1]} : vector<28x8xf32> to vector<26x8xf32>
    %19 = vector.extract_strided_slice %14 {offsets = [26, 0], sizes = [2, 8], strides = [1, 1]} : vector<28x8xf32> to vector<2x8xf32>
    %20 = tpu.concatenate %18, %19 in 0 : vector<26x8xf32>, vector<2x8xf32> -> vector<28x8xf32>
    %21 = arith.maximumf %17, %20 : vector<28x8xf32>
    %22 = arith.maximumf %14, %21 : vector<28x8xf32>
    %cst_8 = arith.constant 0.000000e+00 : f32
    %23 = vector.broadcast %cst_8 : f32 to vector<28x8xf32>
    %24 = arith.maximumf %22, %23 : vector<28x8xf32>
    %cst_9 = arith.constant 0.000000e+00 : f32
    %25 = vector.broadcast %cst_9 : f32 to vector<2x8xf32>
    %26 = vector.extract_strided_slice %24 {offsets = [0, 0], sizes = [26, 8], strides = [1, 1]} : vector<28x8xf32> to vector<26x8xf32>
    %27 = tpu.concatenate %25, %26 in 0 : vector<2x8xf32>, vector<26x8xf32> -> vector<28x8xf32>
    %28 = vector.extract_strided_slice %24 {offsets = [2, 0], sizes = [26, 8], strides = [1, 1]} : vector<28x8xf32> to vector<26x8xf32>
    %29 = tpu.concatenate %28, %25 in 0 : vector<26x8xf32>, vector<2x8xf32> -> vector<28x8xf32>
    %c32 = arith.constant 32 : index
    %c0_10 = arith.constant 0 : index
    %30 = vector.load %arg1[%c32, %c0_10] : memref<200x128xf32, #tpu.memory_space<vmem>>, vector<8x8xf32>
    %cst_11 = arith.constant dense<0.000000e+00> : vector<28x8xf32>
    %31 = tpu.matmul %27, %30, %cst_11 {dimension_numbers = #tpu.dot_dimension_numbers<[1], [0], [0], [1], [0, 0, 1, 1], [], []>} : vector<28x8xf32>, vector<8x8xf32>, vector<28x8xf32> -> vector<28x8xf32>
    %c40 = arith.constant 40 : index
    %c0_12 = arith.constant 0 : index
    %32 = vector.load %arg1[%c40, %c0_12] : memref<200x128xf32, #tpu.memory_space<vmem>>, vector<8x8xf32>
    %cst_13 = arith.constant dense<0.000000e+00> : vector<28x8xf32>
    %33 = tpu.matmul %24, %32, %cst_13 {dimension_numbers = #tpu.dot_dimension_numbers<[1], [0], [0], [1], [0, 0, 1, 1], [], []>} : vector<28x8xf32>, vector<8x8xf32>, vector<28x8xf32> -> vector<28x8xf32>
    %34 = arith.addf %31, %33 : vector<28x8xf32>
    %c48 = arith.constant 48 : index
    %c0_14 = arith.constant 0 : index
    %35 = vector.load %arg1[%c48, %c0_14] : memref<200x128xf32, #tpu.memory_space<vmem>>, vector<8x8xf32>
    %cst_15 = arith.constant dense<0.000000e+00> : vector<28x8xf32>
    %36 = tpu.matmul %29, %35, %cst_15 {dimension_numbers = #tpu.dot_dimension_numbers<[1], [0], [0], [1], [0, 0, 1, 1], [], []>} : vector<28x8xf32>, vector<8x8xf32>, vector<28x8xf32> -> vector<28x8xf32>
    %37 = arith.addf %34, %36 : vector<28x8xf32>
    %c56 = arith.constant 56 : index
    %c0_16 = arith.constant 0 : index
    %38 = vector.load %arg1[%c56, %c0_16] : memref<200x128xf32, #tpu.memory_space<vmem>>, vector<1x8xf32>
    %39 = vector.broadcast %38 : vector<1x8xf32> to vector<28x8xf32>
    %40 = arith.addf %37, %39 : vector<28x8xf32>
    %41 = vector.extract_strided_slice %40 {offsets = [0, 0], sizes = [2, 8], strides = [1, 1]} : vector<28x8xf32> to vector<2x8xf32>
    %42 = vector.extract_strided_slice %40 {offsets = [0, 0], sizes = [26, 8], strides = [1, 1]} : vector<28x8xf32> to vector<26x8xf32>
    %43 = tpu.concatenate %41, %42 in 0 : vector<2x8xf32>, vector<26x8xf32> -> vector<28x8xf32>
    %44 = vector.extract_strided_slice %40 {offsets = [2, 0], sizes = [26, 8], strides = [1, 1]} : vector<28x8xf32> to vector<26x8xf32>
    %45 = vector.extract_strided_slice %40 {offsets = [26, 0], sizes = [2, 8], strides = [1, 1]} : vector<28x8xf32> to vector<2x8xf32>
    %46 = tpu.concatenate %44, %45 in 0 : vector<26x8xf32>, vector<2x8xf32> -> vector<28x8xf32>
    %47 = arith.maximumf %43, %46 : vector<28x8xf32>
    %48 = arith.maximumf %40, %47 : vector<28x8xf32>
    %cst_17 = arith.constant 0.000000e+00 : f32
    %49 = vector.broadcast %cst_17 : f32 to vector<28x8xf32>
    %50 = arith.maximumf %48, %49 : vector<28x8xf32>
    %c64 = arith.constant 64 : index
    %c0_18 = arith.constant 0 : index
    %51 = vector.load %arg1[%c64, %c0_18] : memref<200x128xf32, #tpu.memory_space<vmem>>, vector<8x64xf32>
    %c72 = arith.constant 72 : index
    %c0_19 = arith.constant 0 : index
    %52 = vector.load %arg1[%c72, %c0_19] : memref<200x128xf32, #tpu.memory_space<vmem>>, vector<16x64xf32>
    %c88 = arith.constant 88 : index
    %c0_20 = arith.constant 0 : index
    %53 = vector.load %arg1[%c88, %c0_20] : memref<200x128xf32, #tpu.memory_space<vmem>>, vector<1x64xf32>
    %cst_21 = arith.constant dense<0.000000e+00> : vector<28x64xf32>
    %54 = tpu.matmul %50, %51, %cst_21 {dimension_numbers = #tpu.dot_dimension_numbers<[1], [0], [0], [1], [0, 0, 1, 1], [], []>} : vector<28x8xf32>, vector<8x64xf32>, vector<28x64xf32> -> vector<28x64xf32>
    %55 = vector.broadcast %53 : vector<1x64xf32> to vector<28x64xf32>
    %56 = arith.addf %54, %55 : vector<28x64xf32>
    %cst_22 = arith.constant 0.000000e+00 : f32
    %57 = vector.broadcast %cst_22 : f32 to vector<2x16xf32>
    %cst_23 = arith.constant 0.000000e+00 : f32
    %58 = vector.broadcast %cst_23 : f32 to vector<2x16xf32>
    %59 = vector.extract_strided_slice %56 {offsets = [0, 0], sizes = [2, 64], strides = [1, 1]} : vector<28x64xf32> to vector<2x64xf32>
    %cst_24 = arith.constant dense<0.000000e+00> : vector<2x64xf32>
    %60 = tpu.matmul %57, %52, %cst_24 {dimension_numbers = #tpu.dot_dimension_numbers<[1], [0], [0], [1], [0, 0, 1, 1], [], []>} : vector<2x16xf32>, vector<16x64xf32>, vector<2x64xf32> -> vector<2x64xf32>
    %61 = arith.addf %59, %60 : vector<2x64xf32>
    %62 = arith.negf %61 : vector<2x64xf32>
    %63 = math.exp %62 : vector<2x64xf32>
    %cst_25 = arith.constant 1.000000e+00 : f32
    %64 = vector.broadcast %cst_25 : f32 to vector<2x64xf32>
    %65 = arith.addf %64, %63 : vector<2x64xf32>
    %66 = arith.divf %64, %65 : vector<2x64xf32>
    %67 = math.tanh %61 : vector<2x64xf32>
    %68 = vector.extract_strided_slice %66 {offsets = [0, 16], sizes = [2, 16], strides = [1, 1]} : vector<2x64xf32> to vector<2x16xf32>
    %69 = arith.mulf %68, %58 : vector<2x16xf32>
    %70 = vector.extract_strided_slice %66 {offsets = [0, 0], sizes = [2, 16], strides = [1, 1]} : vector<2x64xf32> to vector<2x16xf32>
    %71 = vector.extract_strided_slice %67 {offsets = [0, 32], sizes = [2, 16], strides = [1, 1]} : vector<2x64xf32> to vector<2x16xf32>
    %72 = arith.mulf %70, %71 : vector<2x16xf32>
    %73 = arith.addf %69, %72 : vector<2x16xf32>
    %74 = vector.extract_strided_slice %66 {offsets = [0, 48], sizes = [2, 16], strides = [1, 1]} : vector<2x64xf32> to vector<2x16xf32>
    %75 = math.tanh %73 : vector<2x16xf32>
    %76 = arith.mulf %74, %75 : vector<2x16xf32>
    %77 = vector.extract_strided_slice %56 {offsets = [2, 0], sizes = [2, 64], strides = [1, 1]} : vector<28x64xf32> to vector<2x64xf32>
    %cst_26 = arith.constant dense<0.000000e+00> : vector<2x64xf32>
    %78 = tpu.matmul %76, %52, %cst_26 {dimension_numbers = #tpu.dot_dimension_numbers<[1], [0], [0], [1], [0, 0, 1, 1], [], []>} : vector<2x16xf32>, vector<16x64xf32>, vector<2x64xf32> -> vector<2x64xf32>
    %79 = arith.addf %77, %78 : vector<2x64xf32>
    %80 = arith.negf %79 : vector<2x64xf32>
    %81 = math.exp %80 : vector<2x64xf32>
    %cst_27 = arith.constant 1.000000e+00 : f32
    %82 = vector.broadcast %cst_27 : f32 to vector<2x64xf32>
    %83 = arith.addf %82, %81 : vector<2x64xf32>
    %84 = arith.divf %82, %83 : vector<2x64xf32>
    %85 = math.tanh %79 : vector<2x64xf32>
    %86 = vector.extract_strided_slice %84 {offsets = [0, 16], sizes = [2, 16], strides = [1, 1]} : vector<2x64xf32> to vector<2x16xf32>
    %87 = arith.mulf %86, %73 : vector<2x16xf32>
    %88 = vector.extract_strided_slice %84 {offsets = [0, 0], sizes = [2, 16], strides = [1, 1]} : vector<2x64xf32> to vector<2x16xf32>
    %89 = vector.extract_strided_slice %85 {offsets = [0, 32], sizes = [2, 16], strides = [1, 1]} : vector<2x64xf32> to vector<2x16xf32>
    %90 = arith.mulf %88, %89 : vector<2x16xf32>
    %91 = arith.addf %87, %90 : vector<2x16xf32>
    %92 = vector.extract_strided_slice %84 {offsets = [0, 48], sizes = [2, 16], strides = [1, 1]} : vector<2x64xf32> to vector<2x16xf32>
    %93 = math.tanh %91 : vector<2x16xf32>
    %94 = arith.mulf %92, %93 : vector<2x16xf32>
    %95 = vector.extract_strided_slice %56 {offsets = [4, 0], sizes = [2, 64], strides = [1, 1]} : vector<28x64xf32> to vector<2x64xf32>
    %cst_28 = arith.constant dense<0.000000e+00> : vector<2x64xf32>
    %96 = tpu.matmul %94, %52, %cst_28 {dimension_numbers = #tpu.dot_dimension_numbers<[1], [0], [0], [1], [0, 0, 1, 1], [], []>} : vector<2x16xf32>, vector<16x64xf32>, vector<2x64xf32> -> vector<2x64xf32>
    %97 = arith.addf %95, %96 : vector<2x64xf32>
    %98 = arith.negf %97 : vector<2x64xf32>
    %99 = math.exp %98 : vector<2x64xf32>
    %cst_29 = arith.constant 1.000000e+00 : f32
    %100 = vector.broadcast %cst_29 : f32 to vector<2x64xf32>
    %101 = arith.addf %100, %99 : vector<2x64xf32>
    %102 = arith.divf %100, %101 : vector<2x64xf32>
    %103 = math.tanh %97 : vector<2x64xf32>
    %104 = vector.extract_strided_slice %102 {offsets = [0, 16], sizes = [2, 16], strides = [1, 1]} : vector<2x64xf32> to vector<2x16xf32>
    %105 = arith.mulf %104, %91 : vector<2x16xf32>
    %106 = vector.extract_strided_slice %102 {offsets = [0, 0], sizes = [2, 16], strides = [1, 1]} : vector<2x64xf32> to vector<2x16xf32>
    %107 = vector.extract_strided_slice %103 {offsets = [0, 32], sizes = [2, 16], strides = [1, 1]} : vector<2x64xf32> to vector<2x16xf32>
    %108 = arith.mulf %106, %107 : vector<2x16xf32>
    %109 = arith.addf %105, %108 : vector<2x16xf32>
    %110 = vector.extract_strided_slice %102 {offsets = [0, 48], sizes = [2, 16], strides = [1, 1]} : vector<2x64xf32> to vector<2x16xf32>
    %111 = math.tanh %109 : vector<2x16xf32>
    %112 = arith.mulf %110, %111 : vector<2x16xf32>
    %113 = vector.extract_strided_slice %56 {offsets = [6, 0], sizes = [2, 64], strides = [1, 1]} : vector<28x64xf32> to vector<2x64xf32>
    %cst_30 = arith.constant dense<0.000000e+00> : vector<2x64xf32>
    %114 = tpu.matmul %112, %52, %cst_30 {dimension_numbers = #tpu.dot_dimension_numbers<[1], [0], [0], [1], [0, 0, 1, 1], [], []>} : vector<2x16xf32>, vector<16x64xf32>, vector<2x64xf32> -> vector<2x64xf32>
    %115 = arith.addf %113, %114 : vector<2x64xf32>
    %116 = arith.negf %115 : vector<2x64xf32>
    %117 = math.exp %116 : vector<2x64xf32>
    %cst_31 = arith.constant 1.000000e+00 : f32
    %118 = vector.broadcast %cst_31 : f32 to vector<2x64xf32>
    %119 = arith.addf %118, %117 : vector<2x64xf32>
    %120 = arith.divf %118, %119 : vector<2x64xf32>
    %121 = math.tanh %115 : vector<2x64xf32>
    %122 = vector.extract_strided_slice %120 {offsets = [0, 16], sizes = [2, 16], strides = [1, 1]} : vector<2x64xf32> to vector<2x16xf32>
    %123 = arith.mulf %122, %109 : vector<2x16xf32>
    %124 = vector.extract_strided_slice %120 {offsets = [0, 0], sizes = [2, 16], strides = [1, 1]} : vector<2x64xf32> to vector<2x16xf32>
    %125 = vector.extract_strided_slice %121 {offsets = [0, 32], sizes = [2, 16], strides = [1, 1]} : vector<2x64xf32> to vector<2x16xf32>
    %126 = arith.mulf %124, %125 : vector<2x16xf32>
    %127 = arith.addf %123, %126 : vector<2x16xf32>
    %128 = vector.extract_strided_slice %120 {offsets = [0, 48], sizes = [2, 16], strides = [1, 1]} : vector<2x64xf32> to vector<2x16xf32>
    %129 = math.tanh %127 : vector<2x16xf32>
    %130 = arith.mulf %128, %129 : vector<2x16xf32>
    %131 = vector.extract_strided_slice %56 {offsets = [8, 0], sizes = [2, 64], strides = [1, 1]} : vector<28x64xf32> to vector<2x64xf32>
    %cst_32 = arith.constant dense<0.000000e+00> : vector<2x64xf32>
    %132 = tpu.matmul %130, %52, %cst_32 {dimension_numbers = #tpu.dot_dimension_numbers<[1], [0], [0], [1], [0, 0, 1, 1], [], []>} : vector<2x16xf32>, vector<16x64xf32>, vector<2x64xf32> -> vector<2x64xf32>
    %133 = arith.addf %131, %132 : vector<2x64xf32>
    %134 = arith.negf %133 : vector<2x64xf32>
    %135 = math.exp %134 : vector<2x64xf32>
    %cst_33 = arith.constant 1.000000e+00 : f32
    %136 = vector.broadcast %cst_33 : f32 to vector<2x64xf32>
    %137 = arith.addf %136, %135 : vector<2x64xf32>
    %138 = arith.divf %136, %137 : vector<2x64xf32>
    %139 = math.tanh %133 : vector<2x64xf32>
    %140 = vector.extract_strided_slice %138 {offsets = [0, 16], sizes = [2, 16], strides = [1, 1]} : vector<2x64xf32> to vector<2x16xf32>
    %141 = arith.mulf %140, %127 : vector<2x16xf32>
    %142 = vector.extract_strided_slice %138 {offsets = [0, 0], sizes = [2, 16], strides = [1, 1]} : vector<2x64xf32> to vector<2x16xf32>
    %143 = vector.extract_strided_slice %139 {offsets = [0, 32], sizes = [2, 16], strides = [1, 1]} : vector<2x64xf32> to vector<2x16xf32>
    %144 = arith.mulf %142, %143 : vector<2x16xf32>
    %145 = arith.addf %141, %144 : vector<2x16xf32>
    %146 = vector.extract_strided_slice %138 {offsets = [0, 48], sizes = [2, 16], strides = [1, 1]} : vector<2x64xf32> to vector<2x16xf32>
    %147 = math.tanh %145 : vector<2x16xf32>
    %148 = arith.mulf %146, %147 : vector<2x16xf32>
    %149 = vector.extract_strided_slice %56 {offsets = [10, 0], sizes = [2, 64], strides = [1, 1]} : vector<28x64xf32> to vector<2x64xf32>
    %cst_34 = arith.constant dense<0.000000e+00> : vector<2x64xf32>
    %150 = tpu.matmul %148, %52, %cst_34 {dimension_numbers = #tpu.dot_dimension_numbers<[1], [0], [0], [1], [0, 0, 1, 1], [], []>} : vector<2x16xf32>, vector<16x64xf32>, vector<2x64xf32> -> vector<2x64xf32>
    %151 = arith.addf %149, %150 : vector<2x64xf32>
    %152 = arith.negf %151 : vector<2x64xf32>
    %153 = math.exp %152 : vector<2x64xf32>
    %cst_35 = arith.constant 1.000000e+00 : f32
    %154 = vector.broadcast %cst_35 : f32 to vector<2x64xf32>
    %155 = arith.addf %154, %153 : vector<2x64xf32>
    %156 = arith.divf %154, %155 : vector<2x64xf32>
    %157 = math.tanh %151 : vector<2x64xf32>
    %158 = vector.extract_strided_slice %156 {offsets = [0, 16], sizes = [2, 16], strides = [1, 1]} : vector<2x64xf32> to vector<2x16xf32>
    %159 = arith.mulf %158, %145 : vector<2x16xf32>
    %160 = vector.extract_strided_slice %156 {offsets = [0, 0], sizes = [2, 16], strides = [1, 1]} : vector<2x64xf32> to vector<2x16xf32>
    %161 = vector.extract_strided_slice %157 {offsets = [0, 32], sizes = [2, 16], strides = [1, 1]} : vector<2x64xf32> to vector<2x16xf32>
    %162 = arith.mulf %160, %161 : vector<2x16xf32>
    %163 = arith.addf %159, %162 : vector<2x16xf32>
    %164 = vector.extract_strided_slice %156 {offsets = [0, 48], sizes = [2, 16], strides = [1, 1]} : vector<2x64xf32> to vector<2x16xf32>
    %165 = math.tanh %163 : vector<2x16xf32>
    %166 = arith.mulf %164, %165 : vector<2x16xf32>
    %167 = vector.extract_strided_slice %56 {offsets = [12, 0], sizes = [2, 64], strides = [1, 1]} : vector<28x64xf32> to vector<2x64xf32>
    %cst_36 = arith.constant dense<0.000000e+00> : vector<2x64xf32>
    %168 = tpu.matmul %166, %52, %cst_36 {dimension_numbers = #tpu.dot_dimension_numbers<[1], [0], [0], [1], [0, 0, 1, 1], [], []>} : vector<2x16xf32>, vector<16x64xf32>, vector<2x64xf32> -> vector<2x64xf32>
    %169 = arith.addf %167, %168 : vector<2x64xf32>
    %170 = arith.negf %169 : vector<2x64xf32>
    %171 = math.exp %170 : vector<2x64xf32>
    %cst_37 = arith.constant 1.000000e+00 : f32
    %172 = vector.broadcast %cst_37 : f32 to vector<2x64xf32>
    %173 = arith.addf %172, %171 : vector<2x64xf32>
    %174 = arith.divf %172, %173 : vector<2x64xf32>
    %175 = math.tanh %169 : vector<2x64xf32>
    %176 = vector.extract_strided_slice %174 {offsets = [0, 16], sizes = [2, 16], strides = [1, 1]} : vector<2x64xf32> to vector<2x16xf32>
    %177 = arith.mulf %176, %163 : vector<2x16xf32>
    %178 = vector.extract_strided_slice %174 {offsets = [0, 0], sizes = [2, 16], strides = [1, 1]} : vector<2x64xf32> to vector<2x16xf32>
    %179 = vector.extract_strided_slice %175 {offsets = [0, 32], sizes = [2, 16], strides = [1, 1]} : vector<2x64xf32> to vector<2x16xf32>
    %180 = arith.mulf %178, %179 : vector<2x16xf32>
    %181 = arith.addf %177, %180 : vector<2x16xf32>
    %182 = vector.extract_strided_slice %174 {offsets = [0, 48], sizes = [2, 16], strides = [1, 1]} : vector<2x64xf32> to vector<2x16xf32>
    %183 = math.tanh %181 : vector<2x16xf32>
    %184 = arith.mulf %182, %183 : vector<2x16xf32>
    %185 = vector.extract_strided_slice %56 {offsets = [14, 0], sizes = [2, 64], strides = [1, 1]} : vector<28x64xf32> to vector<2x64xf32>
    %cst_38 = arith.constant dense<0.000000e+00> : vector<2x64xf32>
    %186 = tpu.matmul %184, %52, %cst_38 {dimension_numbers = #tpu.dot_dimension_numbers<[1], [0], [0], [1], [0, 0, 1, 1], [], []>} : vector<2x16xf32>, vector<16x64xf32>, vector<2x64xf32> -> vector<2x64xf32>
    %187 = arith.addf %185, %186 : vector<2x64xf32>
    %188 = arith.negf %187 : vector<2x64xf32>
    %189 = math.exp %188 : vector<2x64xf32>
    %cst_39 = arith.constant 1.000000e+00 : f32
    %190 = vector.broadcast %cst_39 : f32 to vector<2x64xf32>
    %191 = arith.addf %190, %189 : vector<2x64xf32>
    %192 = arith.divf %190, %191 : vector<2x64xf32>
    %193 = math.tanh %187 : vector<2x64xf32>
    %194 = vector.extract_strided_slice %192 {offsets = [0, 16], sizes = [2, 16], strides = [1, 1]} : vector<2x64xf32> to vector<2x16xf32>
    %195 = arith.mulf %194, %181 : vector<2x16xf32>
    %196 = vector.extract_strided_slice %192 {offsets = [0, 0], sizes = [2, 16], strides = [1, 1]} : vector<2x64xf32> to vector<2x16xf32>
    %197 = vector.extract_strided_slice %193 {offsets = [0, 32], sizes = [2, 16], strides = [1, 1]} : vector<2x64xf32> to vector<2x16xf32>
    %198 = arith.mulf %196, %197 : vector<2x16xf32>
    %199 = arith.addf %195, %198 : vector<2x16xf32>
    %200 = vector.extract_strided_slice %192 {offsets = [0, 48], sizes = [2, 16], strides = [1, 1]} : vector<2x64xf32> to vector<2x16xf32>
    %201 = math.tanh %199 : vector<2x16xf32>
    %202 = arith.mulf %200, %201 : vector<2x16xf32>
    %203 = vector.extract_strided_slice %56 {offsets = [16, 0], sizes = [2, 64], strides = [1, 1]} : vector<28x64xf32> to vector<2x64xf32>
    %cst_40 = arith.constant dense<0.000000e+00> : vector<2x64xf32>
    %204 = tpu.matmul %202, %52, %cst_40 {dimension_numbers = #tpu.dot_dimension_numbers<[1], [0], [0], [1], [0, 0, 1, 1], [], []>} : vector<2x16xf32>, vector<16x64xf32>, vector<2x64xf32> -> vector<2x64xf32>
    %205 = arith.addf %203, %204 : vector<2x64xf32>
    %206 = arith.negf %205 : vector<2x64xf32>
    %207 = math.exp %206 : vector<2x64xf32>
    %cst_41 = arith.constant 1.000000e+00 : f32
    %208 = vector.broadcast %cst_41 : f32 to vector<2x64xf32>
    %209 = arith.addf %208, %207 : vector<2x64xf32>
    %210 = arith.divf %208, %209 : vector<2x64xf32>
    %211 = math.tanh %205 : vector<2x64xf32>
    %212 = vector.extract_strided_slice %210 {offsets = [0, 16], sizes = [2, 16], strides = [1, 1]} : vector<2x64xf32> to vector<2x16xf32>
    %213 = arith.mulf %212, %199 : vector<2x16xf32>
    %214 = vector.extract_strided_slice %210 {offsets = [0, 0], sizes = [2, 16], strides = [1, 1]} : vector<2x64xf32> to vector<2x16xf32>
    %215 = vector.extract_strided_slice %211 {offsets = [0, 32], sizes = [2, 16], strides = [1, 1]} : vector<2x64xf32> to vector<2x16xf32>
    %216 = arith.mulf %214, %215 : vector<2x16xf32>
    %217 = arith.addf %213, %216 : vector<2x16xf32>
    %218 = vector.extract_strided_slice %210 {offsets = [0, 48], sizes = [2, 16], strides = [1, 1]} : vector<2x64xf32> to vector<2x16xf32>
    %219 = math.tanh %217 : vector<2x16xf32>
    %220 = arith.mulf %218, %219 : vector<2x16xf32>
    %221 = vector.extract_strided_slice %56 {offsets = [18, 0], sizes = [2, 64], strides = [1, 1]} : vector<28x64xf32> to vector<2x64xf32>
    %cst_42 = arith.constant dense<0.000000e+00> : vector<2x64xf32>
    %222 = tpu.matmul %220, %52, %cst_42 {dimension_numbers = #tpu.dot_dimension_numbers<[1], [0], [0], [1], [0, 0, 1, 1], [], []>} : vector<2x16xf32>, vector<16x64xf32>, vector<2x64xf32> -> vector<2x64xf32>
    %223 = arith.addf %221, %222 : vector<2x64xf32>
    %224 = arith.negf %223 : vector<2x64xf32>
    %225 = math.exp %224 : vector<2x64xf32>
    %cst_43 = arith.constant 1.000000e+00 : f32
    %226 = vector.broadcast %cst_43 : f32 to vector<2x64xf32>
    %227 = arith.addf %226, %225 : vector<2x64xf32>
    %228 = arith.divf %226, %227 : vector<2x64xf32>
    %229 = math.tanh %223 : vector<2x64xf32>
    %230 = vector.extract_strided_slice %228 {offsets = [0, 16], sizes = [2, 16], strides = [1, 1]} : vector<2x64xf32> to vector<2x16xf32>
    %231 = arith.mulf %230, %217 : vector<2x16xf32>
    %232 = vector.extract_strided_slice %228 {offsets = [0, 0], sizes = [2, 16], strides = [1, 1]} : vector<2x64xf32> to vector<2x16xf32>
    %233 = vector.extract_strided_slice %229 {offsets = [0, 32], sizes = [2, 16], strides = [1, 1]} : vector<2x64xf32> to vector<2x16xf32>
    %234 = arith.mulf %232, %233 : vector<2x16xf32>
    %235 = arith.addf %231, %234 : vector<2x16xf32>
    %236 = vector.extract_strided_slice %228 {offsets = [0, 48], sizes = [2, 16], strides = [1, 1]} : vector<2x64xf32> to vector<2x16xf32>
    %237 = math.tanh %235 : vector<2x16xf32>
    %238 = arith.mulf %236, %237 : vector<2x16xf32>
    %239 = vector.extract_strided_slice %56 {offsets = [20, 0], sizes = [2, 64], strides = [1, 1]} : vector<28x64xf32> to vector<2x64xf32>
    %cst_44 = arith.constant dense<0.000000e+00> : vector<2x64xf32>
    %240 = tpu.matmul %238, %52, %cst_44 {dimension_numbers = #tpu.dot_dimension_numbers<[1], [0], [0], [1], [0, 0, 1, 1], [], []>} : vector<2x16xf32>, vector<16x64xf32>, vector<2x64xf32> -> vector<2x64xf32>
    %241 = arith.addf %239, %240 : vector<2x64xf32>
    %242 = arith.negf %241 : vector<2x64xf32>
    %243 = math.exp %242 : vector<2x64xf32>
    %cst_45 = arith.constant 1.000000e+00 : f32
    %244 = vector.broadcast %cst_45 : f32 to vector<2x64xf32>
    %245 = arith.addf %244, %243 : vector<2x64xf32>
    %246 = arith.divf %244, %245 : vector<2x64xf32>
    %247 = math.tanh %241 : vector<2x64xf32>
    %248 = vector.extract_strided_slice %246 {offsets = [0, 16], sizes = [2, 16], strides = [1, 1]} : vector<2x64xf32> to vector<2x16xf32>
    %249 = arith.mulf %248, %235 : vector<2x16xf32>
    %250 = vector.extract_strided_slice %246 {offsets = [0, 0], sizes = [2, 16], strides = [1, 1]} : vector<2x64xf32> to vector<2x16xf32>
    %251 = vector.extract_strided_slice %247 {offsets = [0, 32], sizes = [2, 16], strides = [1, 1]} : vector<2x64xf32> to vector<2x16xf32>
    %252 = arith.mulf %250, %251 : vector<2x16xf32>
    %253 = arith.addf %249, %252 : vector<2x16xf32>
    %254 = vector.extract_strided_slice %246 {offsets = [0, 48], sizes = [2, 16], strides = [1, 1]} : vector<2x64xf32> to vector<2x16xf32>
    %255 = math.tanh %253 : vector<2x16xf32>
    %256 = arith.mulf %254, %255 : vector<2x16xf32>
    %257 = vector.extract_strided_slice %56 {offsets = [22, 0], sizes = [2, 64], strides = [1, 1]} : vector<28x64xf32> to vector<2x64xf32>
    %cst_46 = arith.constant dense<0.000000e+00> : vector<2x64xf32>
    %258 = tpu.matmul %256, %52, %cst_46 {dimension_numbers = #tpu.dot_dimension_numbers<[1], [0], [0], [1], [0, 0, 1, 1], [], []>} : vector<2x16xf32>, vector<16x64xf32>, vector<2x64xf32> -> vector<2x64xf32>
    %259 = arith.addf %257, %258 : vector<2x64xf32>
    %260 = arith.negf %259 : vector<2x64xf32>
    %261 = math.exp %260 : vector<2x64xf32>
    %cst_47 = arith.constant 1.000000e+00 : f32
    %262 = vector.broadcast %cst_47 : f32 to vector<2x64xf32>
    %263 = arith.addf %262, %261 : vector<2x64xf32>
    %264 = arith.divf %262, %263 : vector<2x64xf32>
    %265 = math.tanh %259 : vector<2x64xf32>
    %266 = vector.extract_strided_slice %264 {offsets = [0, 16], sizes = [2, 16], strides = [1, 1]} : vector<2x64xf32> to vector<2x16xf32>
    %267 = arith.mulf %266, %253 : vector<2x16xf32>
    %268 = vector.extract_strided_slice %264 {offsets = [0, 0], sizes = [2, 16], strides = [1, 1]} : vector<2x64xf32> to vector<2x16xf32>
    %269 = vector.extract_strided_slice %265 {offsets = [0, 32], sizes = [2, 16], strides = [1, 1]} : vector<2x64xf32> to vector<2x16xf32>
    %270 = arith.mulf %268, %269 : vector<2x16xf32>
    %271 = arith.addf %267, %270 : vector<2x16xf32>
    %272 = vector.extract_strided_slice %264 {offsets = [0, 48], sizes = [2, 16], strides = [1, 1]} : vector<2x64xf32> to vector<2x16xf32>
    %273 = math.tanh %271 : vector<2x16xf32>
    %274 = arith.mulf %272, %273 : vector<2x16xf32>
    %275 = vector.extract_strided_slice %56 {offsets = [24, 0], sizes = [2, 64], strides = [1, 1]} : vector<28x64xf32> to vector<2x64xf32>
    %cst_48 = arith.constant dense<0.000000e+00> : vector<2x64xf32>
    %276 = tpu.matmul %274, %52, %cst_48 {dimension_numbers = #tpu.dot_dimension_numbers<[1], [0], [0], [1], [0, 0, 1, 1], [], []>} : vector<2x16xf32>, vector<16x64xf32>, vector<2x64xf32> -> vector<2x64xf32>
    %277 = arith.addf %275, %276 : vector<2x64xf32>
    %278 = arith.negf %277 : vector<2x64xf32>
    %279 = math.exp %278 : vector<2x64xf32>
    %cst_49 = arith.constant 1.000000e+00 : f32
    %280 = vector.broadcast %cst_49 : f32 to vector<2x64xf32>
    %281 = arith.addf %280, %279 : vector<2x64xf32>
    %282 = arith.divf %280, %281 : vector<2x64xf32>
    %283 = math.tanh %277 : vector<2x64xf32>
    %284 = vector.extract_strided_slice %282 {offsets = [0, 16], sizes = [2, 16], strides = [1, 1]} : vector<2x64xf32> to vector<2x16xf32>
    %285 = arith.mulf %284, %271 : vector<2x16xf32>
    %286 = vector.extract_strided_slice %282 {offsets = [0, 0], sizes = [2, 16], strides = [1, 1]} : vector<2x64xf32> to vector<2x16xf32>
    %287 = vector.extract_strided_slice %283 {offsets = [0, 32], sizes = [2, 16], strides = [1, 1]} : vector<2x64xf32> to vector<2x16xf32>
    %288 = arith.mulf %286, %287 : vector<2x16xf32>
    %289 = arith.addf %285, %288 : vector<2x16xf32>
    %290 = vector.extract_strided_slice %282 {offsets = [0, 48], sizes = [2, 16], strides = [1, 1]} : vector<2x64xf32> to vector<2x16xf32>
    %291 = math.tanh %289 : vector<2x16xf32>
    %292 = arith.mulf %290, %291 : vector<2x16xf32>
    %293 = vector.extract_strided_slice %56 {offsets = [26, 0], sizes = [2, 64], strides = [1, 1]} : vector<28x64xf32> to vector<2x64xf32>
    %cst_50 = arith.constant dense<0.000000e+00> : vector<2x64xf32>
    %294 = tpu.matmul %292, %52, %cst_50 {dimension_numbers = #tpu.dot_dimension_numbers<[1], [0], [0], [1], [0, 0, 1, 1], [], []>} : vector<2x16xf32>, vector<16x64xf32>, vector<2x64xf32> -> vector<2x64xf32>
    %295 = arith.addf %293, %294 : vector<2x64xf32>
    %296 = arith.negf %295 : vector<2x64xf32>
    %297 = math.exp %296 : vector<2x64xf32>
    %cst_51 = arith.constant 1.000000e+00 : f32
    %298 = vector.broadcast %cst_51 : f32 to vector<2x64xf32>
    %299 = arith.addf %298, %297 : vector<2x64xf32>
    %300 = arith.divf %298, %299 : vector<2x64xf32>
    %301 = math.tanh %295 : vector<2x64xf32>
    %302 = vector.extract_strided_slice %300 {offsets = [0, 16], sizes = [2, 16], strides = [1, 1]} : vector<2x64xf32> to vector<2x16xf32>
    %303 = arith.mulf %302, %289 : vector<2x16xf32>
    %304 = vector.extract_strided_slice %300 {offsets = [0, 0], sizes = [2, 16], strides = [1, 1]} : vector<2x64xf32> to vector<2x16xf32>
    %305 = vector.extract_strided_slice %301 {offsets = [0, 32], sizes = [2, 16], strides = [1, 1]} : vector<2x64xf32> to vector<2x16xf32>
    %306 = arith.mulf %304, %305 : vector<2x16xf32>
    %307 = arith.addf %303, %306 : vector<2x16xf32>
    %308 = vector.extract_strided_slice %300 {offsets = [0, 48], sizes = [2, 16], strides = [1, 1]} : vector<2x64xf32> to vector<2x16xf32>
    %309 = math.tanh %307 : vector<2x16xf32>
    %310 = arith.mulf %308, %309 : vector<2x16xf32>
    %c32_52 = arith.constant 32 : index
    %c0_53 = arith.constant 0 : index
    %311 = vector.load %arg0[%c32_52, %c0_53] : memref<48x8xf32, #tpu.memory_space<vmem>>, vector<10x7xf32>
    %c96 = arith.constant 96 : index
    %c0_54 = arith.constant 0 : index
    %312 = vector.load %arg1[%c96, %c0_54] : memref<200x128xf32, #tpu.memory_space<vmem>>, vector<7x64xf32>
    %c104 = arith.constant 104 : index
    %c0_55 = arith.constant 0 : index
    %313 = vector.load %arg1[%c104, %c0_55] : memref<200x128xf32, #tpu.memory_space<vmem>>, vector<16x64xf32>
    %c120 = arith.constant 120 : index
    %c0_56 = arith.constant 0 : index
    %314 = vector.load %arg1[%c120, %c0_56] : memref<200x128xf32, #tpu.memory_space<vmem>>, vector<1x64xf32>
    %cst_57 = arith.constant dense<0.000000e+00> : vector<10x64xf32>
    %315 = tpu.matmul %311, %312, %cst_57 {dimension_numbers = #tpu.dot_dimension_numbers<[1], [0], [0], [1], [0, 0, 1, 1], [], []>} : vector<10x7xf32>, vector<7x64xf32>, vector<10x64xf32> -> vector<10x64xf32>
    %316 = vector.broadcast %314 : vector<1x64xf32> to vector<10x64xf32>
    %317 = arith.addf %315, %316 : vector<10x64xf32>
    %cst_58 = arith.constant 0.000000e+00 : f32
    %318 = vector.broadcast %cst_58 : f32 to vector<2x16xf32>
    %cst_59 = arith.constant 0.000000e+00 : f32
    %319 = vector.broadcast %cst_59 : f32 to vector<2x16xf32>
    %320 = vector.extract_strided_slice %317 {offsets = [0, 0], sizes = [2, 64], strides = [1, 1]} : vector<10x64xf32> to vector<2x64xf32>
    %cst_60 = arith.constant dense<0.000000e+00> : vector<2x64xf32>
    %321 = tpu.matmul %318, %313, %cst_60 {dimension_numbers = #tpu.dot_dimension_numbers<[1], [0], [0], [1], [0, 0, 1, 1], [], []>} : vector<2x16xf32>, vector<16x64xf32>, vector<2x64xf32> -> vector<2x64xf32>
    %322 = arith.addf %320, %321 : vector<2x64xf32>
    %323 = arith.negf %322 : vector<2x64xf32>
    %324 = math.exp %323 : vector<2x64xf32>
    %cst_61 = arith.constant 1.000000e+00 : f32
    %325 = vector.broadcast %cst_61 : f32 to vector<2x64xf32>
    %326 = arith.addf %325, %324 : vector<2x64xf32>
    %327 = arith.divf %325, %326 : vector<2x64xf32>
    %328 = math.tanh %322 : vector<2x64xf32>
    %329 = vector.extract_strided_slice %327 {offsets = [0, 16], sizes = [2, 16], strides = [1, 1]} : vector<2x64xf32> to vector<2x16xf32>
    %330 = arith.mulf %329, %319 : vector<2x16xf32>
    %331 = vector.extract_strided_slice %327 {offsets = [0, 0], sizes = [2, 16], strides = [1, 1]} : vector<2x64xf32> to vector<2x16xf32>
    %332 = vector.extract_strided_slice %328 {offsets = [0, 32], sizes = [2, 16], strides = [1, 1]} : vector<2x64xf32> to vector<2x16xf32>
    %333 = arith.mulf %331, %332 : vector<2x16xf32>
    %334 = arith.addf %330, %333 : vector<2x16xf32>
    %335 = vector.extract_strided_slice %327 {offsets = [0, 48], sizes = [2, 16], strides = [1, 1]} : vector<2x64xf32> to vector<2x16xf32>
    %336 = math.tanh %334 : vector<2x16xf32>
    %337 = arith.mulf %335, %336 : vector<2x16xf32>
    %338 = vector.extract_strided_slice %317 {offsets = [2, 0], sizes = [2, 64], strides = [1, 1]} : vector<10x64xf32> to vector<2x64xf32>
    %cst_62 = arith.constant dense<0.000000e+00> : vector<2x64xf32>
    %339 = tpu.matmul %337, %313, %cst_62 {dimension_numbers = #tpu.dot_dimension_numbers<[1], [0], [0], [1], [0, 0, 1, 1], [], []>} : vector<2x16xf32>, vector<16x64xf32>, vector<2x64xf32> -> vector<2x64xf32>
    %340 = arith.addf %338, %339 : vector<2x64xf32>
    %341 = arith.negf %340 : vector<2x64xf32>
    %342 = math.exp %341 : vector<2x64xf32>
    %cst_63 = arith.constant 1.000000e+00 : f32
    %343 = vector.broadcast %cst_63 : f32 to vector<2x64xf32>
    %344 = arith.addf %343, %342 : vector<2x64xf32>
    %345 = arith.divf %343, %344 : vector<2x64xf32>
    %346 = math.tanh %340 : vector<2x64xf32>
    %347 = vector.extract_strided_slice %345 {offsets = [0, 16], sizes = [2, 16], strides = [1, 1]} : vector<2x64xf32> to vector<2x16xf32>
    %348 = arith.mulf %347, %334 : vector<2x16xf32>
    %349 = vector.extract_strided_slice %345 {offsets = [0, 0], sizes = [2, 16], strides = [1, 1]} : vector<2x64xf32> to vector<2x16xf32>
    %350 = vector.extract_strided_slice %346 {offsets = [0, 32], sizes = [2, 16], strides = [1, 1]} : vector<2x64xf32> to vector<2x16xf32>
    %351 = arith.mulf %349, %350 : vector<2x16xf32>
    %352 = arith.addf %348, %351 : vector<2x16xf32>
    %353 = vector.extract_strided_slice %345 {offsets = [0, 48], sizes = [2, 16], strides = [1, 1]} : vector<2x64xf32> to vector<2x16xf32>
    %354 = math.tanh %352 : vector<2x16xf32>
    %355 = arith.mulf %353, %354 : vector<2x16xf32>
    %356 = vector.extract_strided_slice %317 {offsets = [4, 0], sizes = [2, 64], strides = [1, 1]} : vector<10x64xf32> to vector<2x64xf32>
    %cst_64 = arith.constant dense<0.000000e+00> : vector<2x64xf32>
    %357 = tpu.matmul %355, %313, %cst_64 {dimension_numbers = #tpu.dot_dimension_numbers<[1], [0], [0], [1], [0, 0, 1, 1], [], []>} : vector<2x16xf32>, vector<16x64xf32>, vector<2x64xf32> -> vector<2x64xf32>
    %358 = arith.addf %356, %357 : vector<2x64xf32>
    %359 = arith.negf %358 : vector<2x64xf32>
    %360 = math.exp %359 : vector<2x64xf32>
    %cst_65 = arith.constant 1.000000e+00 : f32
    %361 = vector.broadcast %cst_65 : f32 to vector<2x64xf32>
    %362 = arith.addf %361, %360 : vector<2x64xf32>
    %363 = arith.divf %361, %362 : vector<2x64xf32>
    %364 = math.tanh %358 : vector<2x64xf32>
    %365 = vector.extract_strided_slice %363 {offsets = [0, 16], sizes = [2, 16], strides = [1, 1]} : vector<2x64xf32> to vector<2x16xf32>
    %366 = arith.mulf %365, %352 : vector<2x16xf32>
    %367 = vector.extract_strided_slice %363 {offsets = [0, 0], sizes = [2, 16], strides = [1, 1]} : vector<2x64xf32> to vector<2x16xf32>
    %368 = vector.extract_strided_slice %364 {offsets = [0, 32], sizes = [2, 16], strides = [1, 1]} : vector<2x64xf32> to vector<2x16xf32>
    %369 = arith.mulf %367, %368 : vector<2x16xf32>
    %370 = arith.addf %366, %369 : vector<2x16xf32>
    %371 = vector.extract_strided_slice %363 {offsets = [0, 48], sizes = [2, 16], strides = [1, 1]} : vector<2x64xf32> to vector<2x16xf32>
    %372 = math.tanh %370 : vector<2x16xf32>
    %373 = arith.mulf %371, %372 : vector<2x16xf32>
    %374 = vector.extract_strided_slice %317 {offsets = [6, 0], sizes = [2, 64], strides = [1, 1]} : vector<10x64xf32> to vector<2x64xf32>
    %cst_66 = arith.constant dense<0.000000e+00> : vector<2x64xf32>
    %375 = tpu.matmul %373, %313, %cst_66 {dimension_numbers = #tpu.dot_dimension_numbers<[1], [0], [0], [1], [0, 0, 1, 1], [], []>} : vector<2x16xf32>, vector<16x64xf32>, vector<2x64xf32> -> vector<2x64xf32>
    %376 = arith.addf %374, %375 : vector<2x64xf32>
    %377 = arith.negf %376 : vector<2x64xf32>
    %378 = math.exp %377 : vector<2x64xf32>
    %cst_67 = arith.constant 1.000000e+00 : f32
    %379 = vector.broadcast %cst_67 : f32 to vector<2x64xf32>
    %380 = arith.addf %379, %378 : vector<2x64xf32>
    %381 = arith.divf %379, %380 : vector<2x64xf32>
    %382 = math.tanh %376 : vector<2x64xf32>
    %383 = vector.extract_strided_slice %381 {offsets = [0, 16], sizes = [2, 16], strides = [1, 1]} : vector<2x64xf32> to vector<2x16xf32>
    %384 = arith.mulf %383, %370 : vector<2x16xf32>
    %385 = vector.extract_strided_slice %381 {offsets = [0, 0], sizes = [2, 16], strides = [1, 1]} : vector<2x64xf32> to vector<2x16xf32>
    %386 = vector.extract_strided_slice %382 {offsets = [0, 32], sizes = [2, 16], strides = [1, 1]} : vector<2x64xf32> to vector<2x16xf32>
    %387 = arith.mulf %385, %386 : vector<2x16xf32>
    %388 = arith.addf %384, %387 : vector<2x16xf32>
    %389 = vector.extract_strided_slice %381 {offsets = [0, 48], sizes = [2, 16], strides = [1, 1]} : vector<2x64xf32> to vector<2x16xf32>
    %390 = math.tanh %388 : vector<2x16xf32>
    %391 = arith.mulf %389, %390 : vector<2x16xf32>
    %392 = vector.extract_strided_slice %317 {offsets = [8, 0], sizes = [2, 64], strides = [1, 1]} : vector<10x64xf32> to vector<2x64xf32>
    %cst_68 = arith.constant dense<0.000000e+00> : vector<2x64xf32>
    %393 = tpu.matmul %391, %313, %cst_68 {dimension_numbers = #tpu.dot_dimension_numbers<[1], [0], [0], [1], [0, 0, 1, 1], [], []>} : vector<2x16xf32>, vector<16x64xf32>, vector<2x64xf32> -> vector<2x64xf32>
    %394 = arith.addf %392, %393 : vector<2x64xf32>
    %395 = arith.negf %394 : vector<2x64xf32>
    %396 = math.exp %395 : vector<2x64xf32>
    %cst_69 = arith.constant 1.000000e+00 : f32
    %397 = vector.broadcast %cst_69 : f32 to vector<2x64xf32>
    %398 = arith.addf %397, %396 : vector<2x64xf32>
    %399 = arith.divf %397, %398 : vector<2x64xf32>
    %400 = math.tanh %394 : vector<2x64xf32>
    %401 = vector.extract_strided_slice %399 {offsets = [0, 16], sizes = [2, 16], strides = [1, 1]} : vector<2x64xf32> to vector<2x16xf32>
    %402 = arith.mulf %401, %388 : vector<2x16xf32>
    %403 = vector.extract_strided_slice %399 {offsets = [0, 0], sizes = [2, 16], strides = [1, 1]} : vector<2x64xf32> to vector<2x16xf32>
    %404 = vector.extract_strided_slice %400 {offsets = [0, 32], sizes = [2, 16], strides = [1, 1]} : vector<2x64xf32> to vector<2x16xf32>
    %405 = arith.mulf %403, %404 : vector<2x16xf32>
    %406 = arith.addf %402, %405 : vector<2x16xf32>
    %407 = vector.extract_strided_slice %399 {offsets = [0, 48], sizes = [2, 16], strides = [1, 1]} : vector<2x64xf32> to vector<2x16xf32>
    %408 = math.tanh %406 : vector<2x16xf32>
    %409 = arith.mulf %407, %408 : vector<2x16xf32>
    %c128 = arith.constant 128 : index
    %c0_70 = arith.constant 0 : index
    %410 = vector.load %arg1[%c128, %c0_70] : memref<200x128xf32, #tpu.memory_space<vmem>>, vector<16x2xf32>
    %cst_71 = arith.constant dense<0.000000e+00> : vector<2x2xf32>
    %411 = tpu.matmul %310, %410, %cst_71 {dimension_numbers = #tpu.dot_dimension_numbers<[1], [0], [0], [1], [0, 0, 1, 1], [], []>} : vector<2x16xf32>, vector<16x2xf32>, vector<2x2xf32> -> vector<2x2xf32>
    %c144 = arith.constant 144 : index
    %c0_72 = arith.constant 0 : index
    %412 = vector.load %arg1[%c144, %c0_72] : memref<200x128xf32, #tpu.memory_space<vmem>>, vector<16x2xf32>
    %cst_73 = arith.constant dense<0.000000e+00> : vector<2x2xf32>
    %413 = tpu.matmul %307, %412, %cst_73 {dimension_numbers = #tpu.dot_dimension_numbers<[1], [0], [0], [1], [0, 0, 1, 1], [], []>} : vector<2x16xf32>, vector<16x2xf32>, vector<2x2xf32> -> vector<2x2xf32>
    %414 = arith.addf %411, %413 : vector<2x2xf32>
    %c160 = arith.constant 160 : index
    %c0_74 = arith.constant 0 : index
    %415 = vector.load %arg1[%c160, %c0_74] : memref<200x128xf32, #tpu.memory_space<vmem>>, vector<16x2xf32>
    %cst_75 = arith.constant dense<0.000000e+00> : vector<2x2xf32>
    %416 = tpu.matmul %409, %415, %cst_75 {dimension_numbers = #tpu.dot_dimension_numbers<[1], [0], [0], [1], [0, 0, 1, 1], [], []>} : vector<2x16xf32>, vector<16x2xf32>, vector<2x2xf32> -> vector<2x2xf32>
    %417 = arith.addf %414, %416 : vector<2x2xf32>
    %c176 = arith.constant 176 : index
    %c0_76 = arith.constant 0 : index
    %418 = vector.load %arg1[%c176, %c0_76] : memref<200x128xf32, #tpu.memory_space<vmem>>, vector<16x2xf32>
    %cst_77 = arith.constant dense<0.000000e+00> : vector<2x2xf32>
    %419 = tpu.matmul %406, %418, %cst_77 {dimension_numbers = #tpu.dot_dimension_numbers<[1], [0], [0], [1], [0, 0, 1, 1], [], []>} : vector<2x16xf32>, vector<16x2xf32>, vector<2x2xf32> -> vector<2x2xf32>
    %420 = arith.addf %417, %419 : vector<2x2xf32>
    %c192 = arith.constant 192 : index
    %c0_78 = arith.constant 0 : index
    %421 = vector.load %arg1[%c192, %c0_78] : memref<200x128xf32, #tpu.memory_space<vmem>>, vector<1x2xf32>
    %422 = vector.broadcast %421 : vector<1x2xf32> to vector<2x2xf32>
    %423 = arith.addf %420, %422 : vector<2x2xf32>
    %cst_79 = arith.constant dense<0xFF800000> : vector<2xf32>
    %424 = vector.multi_reduction <maximumf>, %423, %cst_79 [1] : vector<2x2xf32> to vector<2xf32>
    %425 = vector.shape_cast %424 : vector<2xf32> to vector<2x1xf32>
    %426 = vector.broadcast %425 : vector<2x1xf32> to vector<2x2xf32>
    %427 = arith.subf %423, %426 : vector<2x2xf32>
    %428 = math.exp %427 : vector<2x2xf32>
    %cst_80 = arith.constant dense<0.000000e+00> : vector<2xf32>
    %429 = vector.multi_reduction <add>, %428, %cst_80 [1] : vector<2x2xf32> to vector<2xf32>
    %430 = vector.shape_cast %429 : vector<2xf32> to vector<2x1xf32>
    %431 = math.log %430 : vector<2x1xf32>
    %432 = vector.broadcast %431 : vector<2x1xf32> to vector<2x2xf32>
    %433 = arith.subf %427, %432 : vector<2x2xf32>
    %c0_81 = arith.constant 0 : index
    %c0_82 = arith.constant 0 : index
    %434 = vector.load %arg2[%c0_81, %c0_82] : memref<2x2xf32, #tpu.memory_space<vmem>>, vector<2x2xf32>
    tpu.vector_store %arg2[%c0_81, %c0_82], %433 {strides = array<i32>} : memref<2x2xf32, #tpu.memory_space<vmem>>, vector<2x2xf32>,
    return
  }
}

</mosaic_0001>

<llo_original>
// kernel: forward.1
$region0: #{forward.1}
  #allocation0 [shape = 'u32[]', space=smem, size = 0x4, offset = 0x4, fixed_abs, tag = 'smem constant byte address 0x4 - core index']
  #allocation1 [shape = 'u32[72,128]{1,0:T(1,128)}', space=vmem, size = 0x9000, scoped, tag = 'internal scratch']
  %s0 = inlined_call_operand.vmem [shape: f32[48,8], index: 0, kind: input, shape index: {}]
  %s1 = inlined_call_operand.hbm [shape: f32[200,128], index: 1, kind: input, shape index: {}]
  %s2 = inlined_call_operand.hbm [shape: f32[2,2], index: 2, kind: output, shape index: {}]
  %s3 = sld [smem:[#allocation0]]
  $region22: #{forward.1} parent=0
    _
  %s5 = ssub.s32 1, %s3
  %s6 = scalar_select 0, %s5, %s3
  $region1: #{forward.1} parent=0
    #allocation2 [shape = 'u8[102400]{0}', space=vmem, size = 0x19000, scoped, tag = 'input window, operand 1, single buffered']
    #allocation3 [shape = 's32[1]{0}', space=sflag, size = 0x4, scoped, tag = 'scoped memory for forward.1']
    #allocation4 [shape = 's32[1]{0}', space=sflag, size = 0x4, scoped, tag = 'scoped memory for forward.1']
    #allocation5 [shape = 'u8[1024]{0}', space=vmem, size = 0x400, scoped, tag = 'output window, operand 0, single buffered']
    %7 = vsyncpa [#allocation3], 0
    %8 = vsyncpa [#allocation4], 0
    // Predicated region
    $region2: #{forward.1} parent=1 // pred_check
      _
    $region3: #{forward.1} parent=1 // pred_check_branch
      %10 = sbr.rel (0) target = $region5
    $region4: #{forward.1} parent=1 // pred_region
      _
    $region5: #{forward.1} parent=1 // pred_fallthru
      _
    // Predicated region
    $region6: #{forward.1} parent=1 // pred_check
      _
    $region7: #{forward.1} parent=1 // pred_check_branch
      %12 = sbr.rel (0) target = $region9
    $region8: #{forward.1} parent=1 // pred_region
      %14 = vsyncadd [#allocation3], 0
      %s15 = sshll.u32 %s1, 4
      %s16 = int_to_ptr.hbm [resolvable:$true] %s15
      %s17 = sshll.u32 [#allocation2], 4
      %s18 = int_to_ptr.vmem [resolvable:$true] %s17
      %23 = dma.hbm_to_vmem [thread:$0]  %s16, 3200, %s18, [#allocation3], 128, 128, 8
    $region9: #{forward.1} parent=1 // pred_fallthru
      _
    // Predicated region
    $region10: #{forward.1} parent=1 // pred_check
      _
    $region11: #{forward.1} parent=1 // pred_check_branch
      %25 = sbr.rel (0) target = $region13
    $region12: #{forward.1} parent=1 // pred_region
      %27 = dma.done [#allocation3], 3200
    $region13: #{forward.1} parent=1 // pred_fallthru
      _
    %v28 = vld [vmem:[%s0] sm:$0xff]
    %v29 = vld [vmem:[%s0 + $0x8] sm:$0xff]
    %v30 = vld [vmem:[%s0 + $0x10] sm:$0xff]
    %v31 = vld [vmem:[%s0 + $0x18] sm:$0xff]
    %v32 = vld [vmem:[#allocation2] sm:$0xf]
    %v33 = vld [vmem:[#allocation2 + $0x8] sm:$0xf]
    %vm38 = vcmask 1045504
    %v39 = vrot.slane %v28, 2
    %v40 = vrot.slane %v29, 2
    %v41 = vsel %vm38, %v39, %v40
    %v42 = vrot.slane %v30, 2
    %v43 = vsel %vm38, %v40, %v42
    %v44 = vrot.slane %v31, 2
    %v45 = vsel %vm38, %v42, %v44
    %vm46 = vcmask 31744
    %v47 = vsel %vm46, %v41, 0
    %v49 = vsel %vm46, %v43, 0
    %v51 = vsel %vm46, %v45, 0
    %v53 = vsel %vm46, %v44, 0
    %vm55 = vcmask 1043456
    %v57 = vsel %vm55, %v33, 0
    %59 = vmatpush.msra.mxu0 0.0
    %60 = vmatpush.msra.mxu0 0.0
    %61 = vmatpush.msra.mxu0 0.0
    %62 = vmatpush.msra.mxu0 0.0
    %63 = vmatpush.msra.mxu0 0.0
    %64 = vmatpush.msra.mxu0 0.0
    %65 = vmatpush.msra.mxu0 0.0
    %66 = vmatpush.msra.mxu0 0.0
    %67 = vmatpush.msra.mxu0 0.0
    %68 = vmatpush.msra.mxu0 0.0
    %69 = vmatpush.msra.mxu0 0.0
    %70 = vmatpush.msra.mxu0 0.0
    %71 = vmatpush.msra.mxu0 0.0
    %72 = vmatpush.msra.mxu0 0.0
    %73 = vmatpush.msra.mxu0 0.0
    %74 = vmatpush.msra.mxu0 %v57
    %75 = vmatmul.f32.gmra.mxu0 %v47
    %v76 = vpop.f32.mrf.mxu0
    %v77 = vadd.f32 0.0, %v76
    %78 = vmatmul.f32.gmra.mxu0 %v49
    %v79 = vpop.f32.mrf.mxu0
    %v80 = vadd.f32 0.0, %v79
    %81 = vmatmul.f32.gmra.mxu0 %v51
    %v82 = vpop.f32.mrf.mxu0
    %v83 = vadd.f32 0.0, %v82
    %84 = vmatmul.f32.gmra.mxu0 %v53
    %v85 = vpop.f32.mrf.mxu0
    %v86 = vadd.f32 0.0, %v85
    %87 = vdwg.mxu0
    %v88 = vsel %vm46, %v28, 0
    %v90 = vsel %vm46, %v29, 0
    %v92 = vsel %vm46, %v30, 0
    %v94 = vsel %vm46, %v31, 0
    %v97 = vsel %vm55, %v32, 0
    %99 = vmatpush.msra.mxu0 0.0
    %100 = vmatpush.msra.mxu0 0.0
    %101 = vmatpush.msra.mxu0 0.0
    %102 = vmatpush.msra.mxu0 0.0
    %103 = vmatpush.msra.mxu0 0.0
    %104 = vmatpush.msra.mxu0 0.0
    %105 = vmatpush.msra.mxu0 0.0
    %106 = vmatpush.msra.mxu0 0.0
    %107 = vmatpush.msra.mxu0 0.0
    %108 = vmatpush.msra.mxu0 0.0
    %109 = vmatpush.msra.mxu0 0.0
    %110 = vmatpush.msra.mxu0 0.0
    %111 = vmatpush.msra.mxu0 0.0
    %112 = vmatpush.msra.mxu0 0.0
    %113 = vmatpush.msra.mxu0 0.0
    %114 = vmatpush.msra.mxu0 %v97
    %115 = vmatmul.f32.gmra.mxu0 %v88
    %v116 = vpop.f32.mrf.mxu0
    %v117 = vadd.f32 %v77, %v116
    %118 = vmatmul.f32.gmra.mxu0 %v90
    %v119 = vpop.f32.mrf.mxu0
    %v120 = vadd.f32 %v80, %v119
    %121 = vmatmul.f32.gmra.mxu0 %v92
    %v122 = vpop.f32.mrf.mxu0
    %v123 = vadd.f32 %v83, %v122
    %124 = vmatmul.f32.gmra.mxu0 %v94
    %v125 = vpop.f32.mrf.mxu0
    %v126 = vadd.f32 %v86, %v125
    %127 = vdwg.mxu0
    %v128 = vld [vmem:[#allocation2 + $0x10] sm:$0xf]
    %v129 = vrot.slane %v28, 4
    %v130 = vrot.slane %v29, 4
    %v131 = vsel %vm55, %v129, %v130
    %v132 = vrot.slane %v30, 4
    %v133 = vsel %vm55, %v130, %v132
    %v134 = vrot.slane %v31, 4
    %v135 = vsel %vm55, %v132, %v134
    %v136 = vsel %vm46, %v131, 0
    %v138 = vsel %vm46, %v133, 0
    %v140 = vsel %vm46, %v135, 0
    %v142 = vsel %vm46, %v134, 0
    %v145 = vsel %vm55, %v128, 0
    %147 = vmatpush.msra.mxu0 0.0
    %148 = vmatpush.msra.mxu0 0.0
    %149 = vmatpush.msra.mxu0 0.0
    %150 = vmatpush.msra.mxu0 0.0
    %151 = vmatpush.msra.mxu0 0.0
    %152 = vmatpush.msra.mxu0 0.0
    %153 = vmatpush.msra.mxu0 0.0
    %154 = vmatpush.msra.mxu0 0.0
    %155 = vmatpush.msra.mxu0 0.0
    %156 = vmatpush.msra.mxu0 0.0
    %157 = vmatpush.msra.mxu0 0.0
    %158 = vmatpush.msra.mxu0 0.0
    %159 = vmatpush.msra.mxu0 0.0
    %160 = vmatpush.msra.mxu0 0.0
    %161 = vmatpush.msra.mxu0 0.0
    %162 = vmatpush.msra.mxu0 %v145
    %163 = vmatmul.f32.gmra.mxu0 %v136
    %v164 = vpop.f32.mrf.mxu0
    %v165 = vadd.f32 0.0, %v164
    %166 = vmatmul.f32.gmra.mxu0 %v138
    %v167 = vpop.f32.mrf.mxu0
    %v168 = vadd.f32 0.0, %v167
    %169 = vmatmul.f32.gmra.mxu0 %v140
    %v170 = vpop.f32.mrf.mxu0
    %v171 = vadd.f32 0.0, %v170
    %172 = vmatmul.f32.gmra.mxu0 %v142
    %v173 = vpop.f32.mrf.mxu0
    %v174 = vadd.f32 0.0, %v173
    %175 = vdwg.mxu0
    %v176 = vadd.f32 %v117, %v165
    %v177 = vadd.f32 %v120, %v168
    %v178 = vadd.f32 %v123, %v171
    %v179 = vadd.f32 %v126, %v174
    %v180 = vld [vmem:[#allocation2 + $0x18] sm:$0x1]
    %v181 = vperm.slane %v180, 0
    %v182 = vadd.f32 %v176, %v181
    %v183 = vadd.f32 %v177, %v181
    %v184 = vadd.f32 %v178, %v181
    %v185 = vadd.f32 %v179, %v181
    %vm190 = vcmask 1041408
    %v191 = vrot.slane %v182, 6
    %v192 = vrot.slane %v183, 6
    %v193 = vsel %vm190, %v191, %v192
    %v194 = vrot.slane %v184, 6
    %v195 = vsel %vm190, %v192, %v194
    %v196 = vrot.slane %v185, 6
    %v197 = vsel %vm190, %v194, %v196
    %v202 = vsel %vm190, %v182, %v191
    %v203 = vrot.slane %v182, 2
    %v204 = vrot.slane %v183, 2
    %v205 = vsel %vm38, %v203, %v204
    %v206 = vrot.slane %v184, 2
    %v207 = vsel %vm38, %v204, %v206
    %v208 = vrot.slane %v185, 2
    %v209 = vsel %vm38, %v206, %v208
    %v214 = vsel %vm190, %v208, %v185
    %v215 = vmax.f32 %v202, %v205
    %v216 = vmax.f32 %v193, %v207
    %v217 = vmax.f32 %v195, %v209
    %v218 = vmax.f32 %v197, %v214
    %v219 = vmax.f32 %v182, %v215
    %v220 = vmax.f32 %v183, %v216
    %v221 = vmax.f32 %v184, %v217
    %v222 = vmax.f32 %v185, %v218
    %v223 = vmax.f32 %v219, 0.0
    %v224 = vmax.f32 %v220, 0.0
    %v225 = vmax.f32 %v221, 0.0
    %v226 = vmax.f32 %v222, 0.0
    %v231 = vrot.slane %v223, 6
    %v232 = vrot.slane %v224, 6
    %v233 = vsel %vm190, %v231, %v232
    %v234 = vrot.slane %v225, 6
    %v235 = vsel %vm190, %v232, %v234
    %v236 = vrot.slane %v226, 6
    %v237 = vsel %vm190, %v234, %v236
    %v239 = vsel %vm190, 0.0, %v231
    %v240 = vrot.slane %v223, 2
    %v241 = vrot.slane %v224, 2
    %v242 = vsel %vm38, %v240, %v241
    %v243 = vrot.slane %v225, 2
    %v244 = vsel %vm38, %v241, %v243
    %v245 = vrot.slane %v226, 2
    %v246 = vsel %vm38, %v243, %v245
    %v248 = vsel %vm190, %v245, 0.0
    %v249 = vld [vmem:[#allocation2 + $0x20] sm:$0xff]
    %v250 = vld [vmem:[#allocation2 + $0x28] sm:$0xff]
    %vm251 = vcmask 64512
    %v252 = vsel %vm251, %v223, 0
    %v254 = vsel %vm251, %v224, 0
    %v256 = vsel %vm251, %v225, 0
    %v258 = vsel %vm251, %v226, 0
    %260 = vmatpush.msra.mxu0 0.0
    %261 = vmatpush.msra.mxu0 0.0
    %262 = vmatpush.msra.mxu0 0.0
    %263 = vmatpush.msra.mxu0 0.0
    %264 = vmatpush.msra.mxu0 0.0
    %265 = vmatpush.msra.mxu0 0.0
    %266 = vmatpush.msra.mxu0 0.0
    %267 = vmatpush.msra.mxu0 0.0
    %268 = vmatpush.msra.mxu0 0.0
    %269 = vmatpush.msra.mxu0 0.0
    %270 = vmatpush.msra.mxu0 0.0
    %271 = vmatpush.msra.mxu0 0.0
    %272 = vmatpush.msra.mxu0 0.0
    %273 = vmatpush.msra.mxu0 0.0
    %274 = vmatpush.msra.mxu0 0.0
    %275 = vmatpush.msra.mxu0 %v250
    %276 = vmatmul.f32.gmra.mxu0 %v252
    %v277 = vpop.f32.mrf.mxu0
    %v278 = vadd.f32 0.0, %v277
    %279 = vmatmul.f32.gmra.mxu0 %v254
    %v280 = vpop.f32.mrf.mxu0
    %v281 = vadd.f32 0.0, %v280
    %282 = vmatmul.f32.gmra.mxu0 %v256
    %v283 = vpop.f32.mrf.mxu0
    %v284 = vadd.f32 0.0, %v283
    %285 = vmatmul.f32.gmra.mxu0 %v258
    %v286 = vpop.f32.mrf.mxu0
    %v287 = vadd.f32 0.0, %v286
    %288 = vdwg.mxu0
    %v290 = vsel %vm251, %v239, 0
    %v292 = vsel %vm251, %v233, 0
    %v294 = vsel %vm251, %v235, 0
    %v296 = vsel %vm251, %v237, 0
    %298 = vmatpush.msra.mxu0 0.0
    %299 = vmatpush.msra.mxu0 0.0
    %300 = vmatpush.msra.mxu0 0.0
    %301 = vmatpush.msra.mxu0 0.0
    %302 = vmatpush.msra.mxu0 0.0
    %303 = vmatpush.msra.mxu0 0.0
    %304 = vmatpush.msra.mxu0 0.0
    %305 = vmatpush.msra.mxu0 0.0
    %306 = vmatpush.msra.mxu0 0.0
    %307 = vmatpush.msra.mxu0 0.0
    %308 = vmatpush.msra.mxu0 0.0
    %309 = vmatpush.msra.mxu0 0.0
    %310 = vmatpush.msra.mxu0 0.0
    %311 = vmatpush.msra.mxu0 0.0
    %312 = vmatpush.msra.mxu0 0.0
    %313 = vmatpush.msra.mxu0 %v249
    %314 = vmatmul.f32.gmra.mxu0 %v290
    %v315 = vpop.f32.mrf.mxu0
    %v316 = vadd.f32 %v278, %v315
    %317 = vmatmul.f32.gmra.mxu0 %v292
    %v318 = vpop.f32.mrf.mxu0
    %v319 = vadd.f32 %v281, %v318
    %320 = vmatmul.f32.gmra.mxu0 %v294
    %v321 = vpop.f32.mrf.mxu0
    %v322 = vadd.f32 %v284, %v321
    %323 = vmatmul.f32.gmra.mxu0 %v296
    %v324 = vpop.f32.mrf.mxu0
    %v325 = vadd.f32 %v287, %v324
    %326 = vdwg.mxu0
    %v327 = vld [vmem:[#allocation2 + $0x30] sm:$0xff]
    %v328 = vsel %vm251, %v242, 0
    %v330 = vsel %vm251, %v244, 0
    %v332 = vsel %vm251, %v246, 0
    %v335 = vsel %vm251, %v248, 0
    %337 = vmatpush.msra.mxu0 0.0
    %338 = vmatpush.msra.mxu0 0.0
    %339 = vmatpush.msra.mxu0 0.0
    %340 = vmatpush.msra.mxu0 0.0
    %341 = vmatpush.msra.mxu0 0.0
    %342 = vmatpush.msra.mxu0 0.0
    %343 = vmatpush.msra.mxu0 0.0
    %344 = vmatpush.msra.mxu0 0.0
    %345 = vmatpush.msra.mxu0 0.0
    %346 = vmatpush.msra.mxu0 0.0
    %347 = vmatpush.msra.mxu0 0.0
    %348 = vmatpush.msra.mxu0 0.0
    %349 = vmatpush.msra.mxu0 0.0
    %350 = vmatpush.msra.mxu0 0.0
    %351 = vmatpush.msra.mxu0 0.0
    %352 = vmatpush.msra.mxu0 %v327
    %353 = vmatmul.f32.gmra.mxu0 %v328
    %v354 = vpop.f32.mrf.mxu0
    %v355 = vadd.f32 0.0, %v354
    %356 = vmatmul.f32.gmra.mxu0 %v330
    %v357 = vpop.f32.mrf.mxu0
    %v358 = vadd.f32 0.0, %v357
    %359 = vmatmul.f32.gmra.mxu0 %v332
    %v360 = vpop.f32.mrf.mxu0
    %v361 = vadd.f32 0.0, %v360
    %362 = vmatmul.f32.gmra.mxu0 %v335
    %v363 = vpop.f32.mrf.mxu0
    %v364 = vadd.f32 0.0, %v363
    %365 = vdwg.mxu0
    %v366 = vadd.f32 %v316, %v355
    %v367 = vadd.f32 %v319, %v358
    %v368 = vadd.f32 %v322, %v361
    %v369 = vadd.f32 %v325, %v364
    %v370 = vld [vmem:[#allocation2 + $0x38] sm:$0x1]
    %v371 = vperm.slane %v370, 0
    %v372 = vadd.f32 %v366, %v371
    %v373 = vadd.f32 %v367, %v371
    %v374 = vadd.f32 %v368, %v371
    %v375 = vadd.f32 %v369, %v371
    %v380 = vrot.slane %v372, 6
    %v381 = vrot.slane %v373, 6
    %v382 = vsel %vm190, %v380, %v381
    %v383 = vrot.slane %v374, 6
    %v384 = vsel %vm190, %v381, %v383
    %v385 = vrot.slane %v375, 6
    %v386 = vsel %vm190, %v383, %v385
    %v391 = vsel %vm190, %v372, %v380
    %v392 = vrot.slane %v372, 2
    %v393 = vrot.slane %v373, 2
    %v394 = vsel %vm38, %v392, %v393
    %v395 = vrot.slane %v374, 2
    %v396 = vsel %vm38, %v393, %v395
    %v397 = vrot.slane %v375, 2
    %v398 = vsel %vm38, %v395, %v397
    %v403 = vsel %vm190, %v397, %v375
    %v404 = vmax.f32 %v391, %v394
    %v405 = vmax.f32 %v382, %v396
    %v406 = vmax.f32 %v384, %v398
    %v407 = vmax.f32 %v386, %v403
    %v408 = vmax.f32 %v372, %v404
    %v409 = vmax.f32 %v373, %v405
    %v410 = vmax.f32 %v374, %v406
    %v411 = vmax.f32 %v375, %v407
    %v412 = vmax.f32 %v408, 0.0
    %v413 = vmax.f32 %v409, 0.0
    %v414 = vmax.f32 %v410, 0.0
    %v415 = vmax.f32 %v411, 0.0
    %v416 = vld [vmem:[#allocation2 + $0x40] sm:$0xff]
    %v417 = vld [vmem:[#allocation2 + $0x48] sm:$0xff]
    %v418 = vld [vmem:[#allocation2 + $0x50] sm:$0xff]
    %v419 = vld [vmem:[#allocation2 + $0x58] sm:$0x1]
    %v420 = vperm.slane %v419, 0
    %v422 = vsel %vm251, %v412, 0
    %v425 = vsel %vm251, %v413, 0
    %v428 = vsel %vm251, %v414, 0
    %v431 = vsel %vm251, %v415, 0
    %433 = vmatpush.msra.mxu0 0.0
    %434 = vmatpush.msra.mxu0 0.0
    %435 = vmatpush.msra.mxu0 0.0
    %436 = vmatpush.msra.mxu0 0.0
    %437 = vmatpush.msra.mxu0 0.0
    %438 = vmatpush.msra.mxu0 0.0
    %439 = vmatpush.msra.mxu0 0.0
    %440 = vmatpush.msra.mxu0 0.0
    %441 = vmatpush.msra.mxu0 0.0
    %442 = vmatpush.msra.mxu0 0.0
    %443 = vmatpush.msra.mxu0 0.0
    %444 = vmatpush.msra.mxu0 0.0
    %445 = vmatpush.msra.mxu0 0.0
    %446 = vmatpush.msra.mxu0 0.0
    %447 = vmatpush.msra.mxu0 0.0
    %448 = vmatpush.msra.mxu0 %v416
    %449 = vmatmul.f32.gmra.mxu0 %v422
    %v450 = vpop.f32.mrf.mxu0
    %v451 = vadd.f32 %v420, %v450
    %452 = vmatmul.f32.gmra.mxu0 %v425
    %v453 = vpop.f32.mrf.mxu0
    %v454 = vadd.f32 %v420, %v453
    %455 = vmatmul.f32.gmra.mxu0 %v428
    %v456 = vpop.f32.mrf.mxu0
    %v457 = vadd.f32 %v420, %v456
    %458 = vmatmul.f32.gmra.mxu0 %v431
    %v459 = vpop.f32.mrf.mxu0
    %v460 = vadd.f32 %v420, %v459
    %461 = vdwg.mxu0
    %vm462 = vcmask 130048
    %v464 = vsel %vm462, 0.0, 0
    %466 = vmatpush.msra.mxu0 0.0
    %467 = vmatpush.msra.mxu0 0.0
    %468 = vmatpush.msra.mxu0 0.0
    %469 = vmatpush.msra.mxu0 0.0
    %470 = vmatpush.msra.mxu0 0.0
    %471 = vmatpush.msra.mxu0 0.0
    %472 = vmatpush.msra.mxu0 0.0
    %473 = vmatpush.msra.mxu0 0.0
    %474 = vmatpush.msra.mxu0 0.0
    %475 = vmatpush.msra.mxu0 0.0
    %476 = vmatpush.msra.mxu0 0.0
    %477 = vmatpush.msra.mxu0 0.0
    %478 = vmatpush.msra.mxu0 0.0
    %479 = vmatpush.msra.mxu0 0.0
    %480 = vmatpush.msra.mxu0 %v418
    %481 = vmatpush.msra.mxu0 %v417
    %482 = vmatmul.f32.gmra.mxu0 %v464
    %v483 = vpop.f32.mrf.mxu0
    %v484 = vadd.f32 0.0, %v483
    %485 = vdwg.mxu0
    %v486 = vadd.f32 %v451, %v484
    %v487 = vxor.u32 %v486, 2147483648
    %v488 = vmul.f32 %v487, 1.442695
    %v489 = vpow.pop %v488
    %v490 = vadd.f32 %v489, 1.0
    %v491 = vrcp.pop %v490
    %v492 = vmul.f32 %v490, %v491
    %v493 = vsub.f32 1.0, %v492
    %v494 = vmul.f32 %v491, %v493
    %v495 = vadd.f32 %v491, %v494
    %vm496 = vweird.f32 %v490
    %vm497 = vweird.f32 %v491
    %vm498 = vmor %vm496, %vm497
    %v499 = vsel %vm498, %v491, %v495
    %v500 = vand.u32 2147483647, %v490
    %vm501 = vcmp.eq.f32.partialorder %v500, 8.507059e+37
    %v502 = vand.u32 %v490, 2147483648
    %v503 = vor.u32 1.1754944e-38, %v502
    %v504 = vsel %vm501, %v503, %v499
    %v505 = vmul.f32 1.0, %v504
    %v506 = vtanh.pop %v486
    %v507 = vmul.f32 %v505, 0.0
    %509 = vrot.lane.b32.xlu0 %v506, 96
    %v510 = vpop.permute.xlu0 %509
    %v512 = vmul.f32 %v505, %v510
    %514 = vrot.lane.b32.xlu0 %v512, 16
    %v515 = vpop.permute.xlu0 %514
    %v517 = vadd.f32 %v507, %v515
    %v518 = vtanh.pop %v517
    %520 = vrot.lane.b32.xlu0 %v518, 32
    %v521 = vpop.permute.xlu0 %520
    %v523 = vmul.f32 %v505, %v521
    %525 = vrot.lane.b32.xlu0 %v523, 80
    %v526 = vpop.permute.xlu0 %525
    %v527 = vsel %vm462, %v526, 0
    %529 = vmatpush.msra.mxu0 0.0
    %530 = vmatpush.msra.mxu0 0.0
    %531 = vmatpush.msra.mxu0 0.0
    %532 = vmatpush.msra.mxu0 0.0
    %533 = vmatpush.msra.mxu0 0.0
    %534 = vmatpush.msra.mxu0 0.0
    %535 = vmatpush.msra.mxu0 0.0
    %536 = vmatpush.msra.mxu0 0.0
    %537 = vmatpush.msra.mxu0 0.0
    %538 = vmatpush.msra.mxu0 0.0
    %539 = vmatpush.msra.mxu0 0.0
    %540 = vmatpush.msra.mxu0 0.0
    %541 = vmatpush.msra.mxu0 0.0
    %542 = vmatpush.msra.mxu0 0.0
    %543 = vmatpush.msra.mxu0 %v418
    %544 = vmatpush.msra.mxu0 %v417
    %545 = vmatmul.f32.gmra.mxu0 %v527
    %v546 = vpop.f32.mrf.mxu0
    %v547 = vadd.f32 0.0, %v546
    %548 = vdwg.mxu0
    %v550 = vrot.slane %v547, 6
    %v552 = vadd.f32 %v451, %v550
    %v553 = vxor.u32 %v552, 2147483648
    %v554 = vmul.f32 %v553, 1.442695
    %v555 = vpow.pop %v554
    %v556 = vadd.f32 %v555, 1.0
    %v557 = vrcp.pop %v556
    %v558 = vmul.f32 %v556, %v557
    %v559 = vsub.f32 1.0, %v558
    %v560 = vmul.f32 %v557, %v559
    %v561 = vadd.f32 %v557, %v560
    %vm562 = vweird.f32 %v556
    %vm563 = vweird.f32 %v557
    %vm564 = vmor %vm562, %vm563
    %v565 = vsel %vm564, %v557, %v561
    %v566 = vand.u32 2147483647, %v556
    %vm567 = vcmp.eq.f32.partialorder %v566, 8.507059e+37
    %v568 = vand.u32 %v556, 2147483648
    %v569 = vor.u32 1.1754944e-38, %v568
    %v570 = vsel %vm567, %v569, %v565
    %v571 = vmul.f32 1.0, %v570
    %v572 = vtanh.pop %v552
    %v574 = vrot.slane %v517, 6
    %v576 = vmul.f32 %v571, %v574
    %578 = vrot.lane.b32.xlu0 %v572, 96
    %v579 = vpop.permute.xlu0 %578
    %v581 = vmul.f32 %v571, %v579
    %583 = vrot.lane.b32.xlu0 %v581, 16
    %v584 = vpop.permute.xlu0 %583
    %v586 = vadd.f32 %v576, %v584
    %v587 = vtanh.pop %v586
    %589 = vrot.lane.b32.xlu0 %v587, 32
    %v590 = vpop.permute.xlu0 %589
    %v592 = vmul.f32 %v571, %v590
    %v594 = vrot.slane %v592, 2
    %595 = vrot.lane.b32.xlu0 %v594, 80
    %v596 = vpop.permute.xlu0 %595
    %v597 = vsel %vm462, %v596, 0
    %599 = vmatpush.msra.mxu0 0.0
    %600 = vmatpush.msra.mxu0 0.0
    %601 = vmatpush.msra.mxu0 0.0
    %602 = vmatpush.msra.mxu0 0.0
    %603 = vmatpush.msra.mxu0 0.0
    %604 = vmatpush.msra.mxu0 0.0
    %605 = vmatpush.msra.mxu0 0.0
    %606 = vmatpush.msra.mxu0 0.0
    %607 = vmatpush.msra.mxu0 0.0
    %608 = vmatpush.msra.mxu0 0.0
    %609 = vmatpush.msra.mxu0 0.0
    %610 = vmatpush.msra.mxu0 0.0
    %611 = vmatpush.msra.mxu0 0.0
    %612 = vmatpush.msra.mxu0 0.0
    %613 = vmatpush.msra.mxu0 %v418
    %614 = vmatpush.msra.mxu0 %v417
    %615 = vmatmul.f32.gmra.mxu0 %v597
    %v616 = vpop.f32.mrf.mxu0
    %v617 = vadd.f32 0.0, %v616
    %618 = vdwg.mxu0
    %v620 = vrot.slane %v617, 4
    %v622 = vadd.f32 %v451, %v620
    %v623 = vxor.u32 %v622, 2147483648
    %v624 = vmul.f32 %v623, 1.442695
    %v625 = vpow.pop %v624
    %v626 = vadd.f32 %v625, 1.0
    %v627 = vrcp.pop %v626
    %v628 = vmul.f32 %v626, %v627
    %v629 = vsub.f32 1.0, %v628
    %v630 = vmul.f32 %v627, %v629
    %v631 = vadd.f32 %v627, %v630
    %vm632 = vweird.f32 %v626
    %vm633 = vweird.f32 %v627
    %vm634 = vmor %vm632, %vm633
    %v635 = vsel %vm634, %v627, %v631
    %v636 = vand.u32 2147483647, %v626
    %vm637 = vcmp.eq.f32.partialorder %v636, 8.507059e+37
    %v638 = vand.u32 %v626, 2147483648
    %v639 = vor.u32 1.1754944e-38, %v638
    %v640 = vsel %vm637, %v639, %v635
    %v641 = vmul.f32 1.0, %v640
    %v642 = vtanh.pop %v622
    %v644 = vrot.slane %v586, 6
    %v646 = vmul.f32 %v641, %v644
    %648 = vrot.lane.b32.xlu0 %v642, 96
    %v649 = vpop.permute.xlu0 %648
    %v651 = vmul.f32 %v641, %v649
    %653 = vrot.lane.b32.xlu0 %v651, 16
    %v654 = vpop.permute.xlu0 %653
    %v656 = vadd.f32 %v646, %v654
    %v657 = vtanh.pop %v656
    %659 = vrot.lane.b32.xlu0 %v657, 32
    %v660 = vpop.permute.xlu0 %659
    %v662 = vmul.f32 %v641, %v660
    %v664 = vrot.slane %v662, 4
    %665 = vrot.lane.b32.xlu0 %v664, 80
    %v666 = vpop.permute.xlu0 %665
    %v667 = vsel %vm462, %v666, 0
    %669 = vmatpush.msra.mxu0 0.0
    %670 = vmatpush.msra.mxu0 0.0
    %671 = vmatpush.msra.mxu0 0.0
    %672 = vmatpush.msra.mxu0 0.0
    %673 = vmatpush.msra.mxu0 0.0
    %674 = vmatpush.msra.mxu0 0.0
    %675 = vmatpush.msra.mxu0 0.0
    %676 = vmatpush.msra.mxu0 0.0
    %677 = vmatpush.msra.mxu0 0.0
    %678 = vmatpush.msra.mxu0 0.0
    %679 = vmatpush.msra.mxu0 0.0
    %680 = vmatpush.msra.mxu0 0.0
    %681 = vmatpush.msra.mxu0 0.0
    %682 = vmatpush.msra.mxu0 0.0
    %683 = vmatpush.msra.mxu0 %v418
    %684 = vmatpush.msra.mxu0 %v417
    %685 = vmatmul.f32.gmra.mxu0 %v667
    %v686 = vpop.f32.mrf.mxu0
    %v687 = vadd.f32 0.0, %v686
    %688 = vdwg.mxu0
    %v690 = vrot.slane %v687, 2
    %v692 = vadd.f32 %v451, %v690
    %v693 = vxor.u32 %v692, 2147483648
    %v694 = vmul.f32 %v693, 1.442695
    %v695 = vpow.pop %v694
    %v696 = vadd.f32 %v695, 1.0
    %v697 = vrcp.pop %v696
    %v698 = vmul.f32 %v696, %v697
    %v699 = vsub.f32 1.0, %v698
    %v700 = vmul.f32 %v697, %v699
    %v701 = vadd.f32 %v697, %v700
    %vm702 = vweird.f32 %v696
    %vm703 = vweird.f32 %v697
    %vm704 = vmor %vm702, %vm703
    %v705 = vsel %vm704, %v697, %v701
    %v706 = vand.u32 2147483647, %v696
    %vm707 = vcmp.eq.f32.partialorder %v706, 8.507059e+37
    %v708 = vand.u32 %v696, 2147483648
    %v709 = vor.u32 1.1754944e-38, %v708
    %v710 = vsel %vm707, %v709, %v705
    %v711 = vmul.f32 1.0, %v710
    %v712 = vtanh.pop %v692
    %v714 = vrot.slane %v656, 6
    %v716 = vmul.f32 %v711, %v714
    %718 = vrot.lane.b32.xlu0 %v712, 96
    %v719 = vpop.permute.xlu0 %718
    %v721 = vmul.f32 %v711, %v719
    %723 = vrot.lane.b32.xlu0 %v721, 16
    %v724 = vpop.permute.xlu0 %723
    %v726 = vadd.f32 %v716, %v724
    %v727 = vtanh.pop %v726
    %729 = vrot.lane.b32.xlu0 %v727, 32
    %v730 = vpop.permute.xlu0 %729
    %v732 = vmul.f32 %v711, %v730
    %v734 = vrot.slane %v732, 6
    %735 = vrot.lane.b32.xlu0 %v734, 80
    %v736 = vpop.permute.xlu0 %735
    %v737 = vsel %vm462, %v736, 0
    %739 = vmatpush.msra.mxu0 0.0
    %740 = vmatpush.msra.mxu0 0.0
    %741 = vmatpush.msra.mxu0 0.0
    %742 = vmatpush.msra.mxu0 0.0
    %743 = vmatpush.msra.mxu0 0.0
    %744 = vmatpush.msra.mxu0 0.0
    %745 = vmatpush.msra.mxu0 0.0
    %746 = vmatpush.msra.mxu0 0.0
    %747 = vmatpush.msra.mxu0 0.0
    %748 = vmatpush.msra.mxu0 0.0
    %749 = vmatpush.msra.mxu0 0.0
    %750 = vmatpush.msra.mxu0 0.0
    %751 = vmatpush.msra.mxu0 0.0
    %752 = vmatpush.msra.mxu0 0.0
    %753 = vmatpush.msra.mxu0 %v418
    %754 = vmatpush.msra.mxu0 %v417
    %755 = vmatmul.f32.gmra.mxu0 %v737
    %v756 = vpop.f32.mrf.mxu0
    %v757 = vadd.f32 0.0, %v756
    %758 = vdwg.mxu0
    %v759 = vadd.f32 %v454, %v757
    %v760 = vxor.u32 %v759, 2147483648
    %v761 = vmul.f32 %v760, 1.442695
    %v762 = vpow.pop %v761
    %v763 = vadd.f32 %v762, 1.0
    %v764 = vrcp.pop %v763
    %v765 = vmul.f32 %v763, %v764
    %v766 = vsub.f32 1.0, %v765
    %v767 = vmul.f32 %v764, %v766
    %v768 = vadd.f32 %v764, %v767
    %vm769 = vweird.f32 %v763
    %vm770 = vweird.f32 %v764
    %vm771 = vmor %vm769, %vm770
    %v772 = vsel %vm771, %v764, %v768
    %v773 = vand.u32 2147483647, %v763
    %vm774 = vcmp.eq.f32.partialorder %v773, 8.507059e+37
    %v775 = vand.u32 %v763, 2147483648
    %v776 = vor.u32 1.1754944e-38, %v775
    %v777 = vsel %vm774, %v776, %v772
    %v778 = vmul.f32 1.0, %v777
    %v779 = vtanh.pop %v759
    %v781 = vrot.slane %v726, 6
    %v783 = vmul.f32 %v778, %v781
    %785 = vrot.lane.b32.xlu0 %v779, 96
    %v786 = vpop.permute.xlu0 %785
    %v788 = vmul.f32 %v778, %v786
    %790 = vrot.lane.b32.xlu0 %v788, 16
    %v791 = vpop.permute.xlu0 %790
    %v793 = vadd.f32 %v783, %v791
    %v794 = vtanh.pop %v793
    %796 = vrot.lane.b32.xlu0 %v794, 32
    %v797 = vpop.permute.xlu0 %796
    %v799 = vmul.f32 %v778, %v797
    %801 = vrot.lane.b32.xlu0 %v799, 80
    %v802 = vpop.permute.xlu0 %801
    %v803 = vsel %vm462, %v802, 0
    %805 = vmatpush.msra.mxu0 0.0
    %806 = vmatpush.msra.mxu0 0.0
    %807 = vmatpush.msra.mxu0 0.0
    %808 = vmatpush.msra.mxu0 0.0
    %809 = vmatpush.msra.mxu0 0.0
    %810 = vmatpush.msra.mxu0 0.0
    %811 = vmatpush.msra.mxu0 0.0
    %812 = vmatpush.msra.mxu0 0.0
    %813 = vmatpush.msra.mxu0 0.0
    %814 = vmatpush.msra.mxu0 0.0
    %815 = vmatpush.msra.mxu0 0.0
    %816 = vmatpush.msra.mxu0 0.0
    %817 = vmatpush.msra.mxu0 0.0
    %818 = vmatpush.msra.mxu0 0.0
    %819 = vmatpush.msra.mxu0 %v418
    %820 = vmatpush.msra.mxu0 %v417
    %821 = vmatmul.f32.gmra.mxu0 %v803
    %v822 = vpop.f32.mrf.mxu0
    %v823 = vadd.f32 0.0, %v822
    %824 = vdwg.mxu0
    %v826 = vrot.slane %v823, 6
    %v828 = vadd.f32 %v454, %v826
    %v829 = vxor.u32 %v828, 2147483648
    %v830 = vmul.f32 %v829, 1.442695
    %v831 = vpow.pop %v830
    %v832 = vadd.f32 %v831, 1.0
    %v833 = vrcp.pop %v832
    %v834 = vmul.f32 %v832, %v833
    %v835 = vsub.f32 1.0, %v834
    %v836 = vmul.f32 %v833, %v835
    %v837 = vadd.f32 %v833, %v836
    %vm838 = vweird.f32 %v832
    %vm839 = vweird.f32 %v833
    %vm840 = vmor %vm838, %vm839
    %v841 = vsel %vm840, %v833, %v837
    %v842 = vand.u32 2147483647, %v832
    %vm843 = vcmp.eq.f32.partialorder %v842, 8.507059e+37
    %v844 = vand.u32 %v832, 2147483648
    %v845 = vor.u32 1.1754944e-38, %v844
    %v846 = vsel %vm843, %v845, %v841
    %v847 = vmul.f32 1.0, %v846
    %v848 = vtanh.pop %v828
    %v850 = vrot.slane %v793, 6
    %v852 = vmul.f32 %v847, %v850
    %854 = vrot.lane.b32.xlu0 %v848, 96
    %v855 = vpop.permute.xlu0 %854
    %v857 = vmul.f32 %v847, %v855
    %859 = vrot.lane.b32.xlu0 %v857, 16
    %v860 = vpop.permute.xlu0 %859
    %v862 = vadd.f32 %v852, %v860
    %v863 = vtanh.pop %v862
    %865 = vrot.lane.b32.xlu0 %v863, 32
    %v866 = vpop.permute.xlu0 %865
    %v868 = vmul.f32 %v847, %v866
    %v870 = vrot.slane %v868, 2
    %871 = vrot.lane.b32.xlu0 %v870, 80
    %v872 = vpop.permute.xlu0 %871
    %v873 = vsel %vm462, %v872, 0
    %875 = vmatpush.msra.mxu0 0.0
    %876 = vmatpush.msra.mxu0 0.0
    %877 = vmatpush.msra.mxu0 0.0
    %878 = vmatpush.msra.mxu0 0.0
    %879 = vmatpush.msra.mxu0 0.0
    %880 = vmatpush.msra.mxu0 0.0
    %881 = vmatpush.msra.mxu0 0.0
    %882 = vmatpush.msra.mxu0 0.0
    %883 = vmatpush.msra.mxu0 0.0
    %884 = vmatpush.msra.mxu0 0.0
    %885 = vmatpush.msra.mxu0 0.0
    %886 = vmatpush.msra.mxu0 0.0
    %887 = vmatpush.msra.mxu0 0.0
    %888 = vmatpush.msra.mxu0 0.0
    %889 = vmatpush.msra.mxu0 %v418
    %890 = vmatpush.msra.mxu0 %v417
    %891 = vmatmul.f32.gmra.mxu0 %v873
    %v892 = vpop.f32.mrf.mxu0
    %v893 = vadd.f32 0.0, %v892
    %894 = vdwg.mxu0
    %v896 = vrot.slane %v893, 4
    %v898 = vadd.f32 %v454, %v896
    %v899 = vxor.u32 %v898, 2147483648
    %v900 = vmul.f32 %v899, 1.442695
    %v901 = vpow.pop %v900
    %v902 = vadd.f32 %v901, 1.0
    %v903 = vrcp.pop %v902
    %v904 = vmul.f32 %v902, %v903
    %v905 = vsub.f32 1.0, %v904
    %v906 = vmul.f32 %v903, %v905
    %v907 = vadd.f32 %v903, %v906
    %vm908 = vweird.f32 %v902
    %vm909 = vweird.f32 %v903
    %vm910 = vmor %vm908, %vm909
    %v911 = vsel %vm910, %v903, %v907
    %v912 = vand.u32 2147483647, %v902
    %vm913 = vcmp.eq.f32.partialorder %v912, 8.507059e+37
    %v914 = vand.u32 %v902, 2147483648
    %v915 = vor.u32 1.1754944e-38, %v914
    %v916 = vsel %vm913, %v915, %v911
    %v917 = vmul.f32 1.0, %v916
    %v918 = vtanh.pop %v898
    %v920 = vrot.slane %v862, 6
    %v922 = vmul.f32 %v917, %v920
    %924 = vrot.lane.b32.xlu0 %v918, 96
    %v925 = vpop.permute.xlu0 %924
    %v927 = vmul.f32 %v917, %v925
    %929 = vrot.lane.b32.xlu0 %v927, 16
    %v930 = vpop.permute.xlu0 %929
    %v932 = vadd.f32 %v922, %v930
    %v933 = vtanh.pop %v932
    %935 = vrot.lane.b32.xlu0 %v933, 32
    %v936 = vpop.permute.xlu0 %935
    %v938 = vmul.f32 %v917, %v936
    %v940 = vrot.slane %v938, 4
    %941 = vrot.lane.b32.xlu0 %v940, 80
    %v942 = vpop.permute.xlu0 %941
    %v943 = vsel %vm462, %v942, 0
    %945 = vmatpush.msra.mxu0 0.0
    %946 = vmatpush.msra.mxu0 0.0
    %947 = vmatpush.msra.mxu0 0.0
    %948 = vmatpush.msra.mxu0 0.0
    %949 = vmatpush.msra.mxu0 0.0
    %950 = vmatpush.msra.mxu0 0.0
    %951 = vmatpush.msra.mxu0 0.0
    %952 = vmatpush.msra.mxu0 0.0
    %953 = vmatpush.msra.mxu0 0.0
    %954 = vmatpush.msra.mxu0 0.0
    %955 = vmatpush.msra.mxu0 0.0
    %956 = vmatpush.msra.mxu0 0.0
    %957 = vmatpush.msra.mxu0 0.0
    %958 = vmatpush.msra.mxu0 0.0
    %959 = vmatpush.msra.mxu0 %v418
    %960 = vmatpush.msra.mxu0 %v417
    %961 = vmatmul.f32.gmra.mxu0 %v943
    %v962 = vpop.f32.mrf.mxu0
    %v963 = vadd.f32 0.0, %v962
    %964 = vdwg.mxu0
    %v966 = vrot.slane %v963, 2
    %v968 = vadd.f32 %v454, %v966
    %v969 = vxor.u32 %v968, 2147483648
    %v970 = vmul.f32 %v969, 1.442695
    %v971 = vpow.pop %v970
    %v972 = vadd.f32 %v971, 1.0
    %v973 = vrcp.pop %v972
    %v974 = vmul.f32 %v972, %v973
    %v975 = vsub.f32 1.0, %v974
    %v976 = vmul.f32 %v973, %v975
    %v977 = vadd.f32 %v973, %v976
    %vm978 = vweird.f32 %v972
    %vm979 = vweird.f32 %v973
    %vm980 = vmor %vm978, %vm979
    %v981 = vsel %vm980, %v973, %v977
    %v982 = vand.u32 2147483647, %v972
    %vm983 = vcmp.eq.f32.partialorder %v982, 8.507059e+37
    %v984 = vand.u32 %v972, 2147483648
    %v985 = vor.u32 1.1754944e-38, %v984
    %v986 = vsel %vm983, %v985, %v981
    %v987 = vmul.f32 1.0, %v986
    %v988 = vtanh.pop %v968
    %v990 = vrot.slane %v932, 6
    %v992 = vmul.f32 %v987, %v990
    %994 = vrot.lane.b32.xlu0 %v988, 96
    %v995 = vpop.permute.xlu0 %994
    %v997 = vmul.f32 %v987, %v995
    %999 = vrot.lane.b32.xlu0 %v997, 16
    %v1000 = vpop.permute.xlu0 %999
    %v1002 = vadd.f32 %v992, %v1000
    %v1003 = vtanh.pop %v1002
    %1005 = vrot.lane.b32.xlu0 %v1003, 32
    %v1006 = vpop.permute.xlu0 %1005
    %v1008 = vmul.f32 %v987, %v1006
    %v1010 = vrot.slane %v1008, 6
    %1011 = vrot.lane.b32.xlu0 %v1010, 80
    %v1012 = vpop.permute.xlu0 %1011
    %v1013 = vsel %vm462, %v1012, 0
    %1015 = vmatpush.msra.mxu0 0.0
    %1016 = vmatpush.msra.mxu0 0.0
    %1017 = vmatpush.msra.mxu0 0.0
    %1018 = vmatpush.msra.mxu0 0.0
    %1019 = vmatpush.msra.mxu0 0.0
    %1020 = vmatpush.msra.mxu0 0.0
    %1021 = vmatpush.msra.mxu0 0.0
    %1022 = vmatpush.msra.mxu0 0.0
    %1023 = vmatpush.msra.mxu0 0.0
    %1024 = vmatpush.msra.mxu0 0.0
    %1025 = vmatpush.msra.mxu0 0.0
    %1026 = vmatpush.msra.mxu0 0.0
    %1027 = vmatpush.msra.mxu0 0.0
    %1028 = vmatpush.msra.mxu0 0.0
    %1029 = vmatpush.msra.mxu0 %v418
    %1030 = vmatpush.msra.mxu0 %v417
    %1031 = vmatmul.f32.gmra.mxu0 %v1013
    %v1032 = vpop.f32.mrf.mxu0
    %v1033 = vadd.f32 0.0, %v1032
    %1034 = vdwg.mxu0
    %v1035 = vadd.f32 %v457, %v1033
    %v1036 = vxor.u32 %v1035, 2147483648
    %v1037 = vmul.f32 %v1036, 1.442695
    %v1038 = vpow.pop %v1037
    %v1039 = vadd.f32 %v1038, 1.0
    %v1040 = vrcp.pop %v1039
    %v1041 = vmul.f32 %v1039, %v1040
    %v1042 = vsub.f32 1.0, %v1041
    %v1043 = vmul.f32 %v1040, %v1042
    %v1044 = vadd.f32 %v1040, %v1043
    %vm1045 = vweird.f32 %v1039
    %vm1046 = vweird.f32 %v1040
    %vm1047 = vmor %vm1045, %vm1046
    %v1048 = vsel %vm1047, %v1040, %v1044
    %v1049 = vand.u32 2147483647, %v1039
    %vm1050 = vcmp.eq.f32.partialorder %v1049, 8.507059e+37
    %v1051 = vand.u32 %v1039, 2147483648
    %v1052 = vor.u32 1.1754944e-38, %v1051
    %v1053 = vsel %vm1050, %v1052, %v1048
    %v1054 = vmul.f32 1.0, %v1053
    %v1055 = vtanh.pop %v1035
    %v1057 = vrot.slane %v1002, 6
    %v1059 = vmul.f32 %v1054, %v1057
    %1061 = vrot.lane.b32.xlu0 %v1055, 96
    %v1062 = vpop.permute.xlu0 %1061
    %v1064 = vmul.f32 %v1054, %v1062
    %1066 = vrot.lane.b32.xlu0 %v1064, 16
    %v1067 = vpop.permute.xlu0 %1066
    %v1069 = vadd.f32 %v1059, %v1067
    %v1070 = vtanh.pop %v1069
    %1072 = vrot.lane.b32.xlu0 %v1070, 32
    %v1073 = vpop.permute.xlu0 %1072
    %v1075 = vmul.f32 %v1054, %v1073
    %1077 = vrot.lane.b32.xlu0 %v1075, 80
    %v1078 = vpop.permute.xlu0 %1077
    %v1079 = vsel %vm462, %v1078, 0
    %1081 = vmatpush.msra.mxu0 0.0
    %1082 = vmatpush.msra.mxu0 0.0
    %1083 = vmatpush.msra.mxu0 0.0
    %1084 = vmatpush.msra.mxu0 0.0
    %1085 = vmatpush.msra.mxu0 0.0
    %1086 = vmatpush.msra.mxu0 0.0
    %1087 = vmatpush.msra.mxu0 0.0
    %1088 = vmatpush.msra.mxu0 0.0
    %1089 = vmatpush.msra.mxu0 0.0
    %1090 = vmatpush.msra.mxu0 0.0
    %1091 = vmatpush.msra.mxu0 0.0
    %1092 = vmatpush.msra.mxu0 0.0
    %1093 = vmatpush.msra.mxu0 0.0
    %1094 = vmatpush.msra.mxu0 0.0
    %1095 = vmatpush.msra.mxu0 %v418
    %1096 = vmatpush.msra.mxu0 %v417
    %1097 = vmatmul.f32.gmra.mxu0 %v1079
    %v1098 = vpop.f32.mrf.mxu0
    %v1099 = vadd.f32 0.0, %v1098
    %1100 = vdwg.mxu0
    %v1102 = vrot.slane %v1099, 6
    %v1104 = vadd.f32 %v457, %v1102
    %v1105 = vxor.u32 %v1104, 2147483648
    %v1106 = vmul.f32 %v1105, 1.442695
    %v1107 = vpow.pop %v1106
    %v1108 = vadd.f32 %v1107, 1.0
    %v1109 = vrcp.pop %v1108
    %v1110 = vmul.f32 %v1108, %v1109
    %v1111 = vsub.f32 1.0, %v1110
    %v1112 = vmul.f32 %v1109, %v1111
    %v1113 = vadd.f32 %v1109, %v1112
    %vm1114 = vweird.f32 %v1108
    %vm1115 = vweird.f32 %v1109
    %vm1116 = vmor %vm1114, %vm1115
    %v1117 = vsel %vm1116, %v1109, %v1113
    %v1118 = vand.u32 2147483647, %v1108
    %vm1119 = vcmp.eq.f32.partialorder %v1118, 8.507059e+37
    %v1120 = vand.u32 %v1108, 2147483648
    %v1121 = vor.u32 1.1754944e-38, %v1120
    %v1122 = vsel %vm1119, %v1121, %v1117
    %v1123 = vmul.f32 1.0, %v1122
    %v1124 = vtanh.pop %v1104
    %v1126 = vrot.slane %v1069, 6
    %v1128 = vmul.f32 %v1123, %v1126
    %1130 = vrot.lane.b32.xlu0 %v1124, 96
    %v1131 = vpop.permute.xlu0 %1130
    %v1133 = vmul.f32 %v1123, %v1131
    %1135 = vrot.lane.b32.xlu0 %v1133, 16
    %v1136 = vpop.permute.xlu0 %1135
    %v1138 = vadd.f32 %v1128, %v1136
    %v1139 = vtanh.pop %v1138
    %1141 = vrot.lane.b32.xlu0 %v1139, 32
    %v1142 = vpop.permute.xlu0 %1141
    %v1144 = vmul.f32 %v1123, %v1142
    %v1146 = vrot.slane %v1144, 2
    %1147 = vrot.lane.b32.xlu0 %v1146, 80
    %v1148 = vpop.permute.xlu0 %1147
    %v1149 = vsel %vm462, %v1148, 0
    %1151 = vmatpush.msra.mxu0 0.0
    %1152 = vmatpush.msra.mxu0 0.0
    %1153 = vmatpush.msra.mxu0 0.0
    %1154 = vmatpush.msra.mxu0 0.0
    %1155 = vmatpush.msra.mxu0 0.0
    %1156 = vmatpush.msra.mxu0 0.0
    %1157 = vmatpush.msra.mxu0 0.0
    %1158 = vmatpush.msra.mxu0 0.0
    %1159 = vmatpush.msra.mxu0 0.0
    %1160 = vmatpush.msra.mxu0 0.0
    %1161 = vmatpush.msra.mxu0 0.0
    %1162 = vmatpush.msra.mxu0 0.0
    %1163 = vmatpush.msra.mxu0 0.0
    %1164 = vmatpush.msra.mxu0 0.0
    %1165 = vmatpush.msra.mxu0 %v418
    %1166 = vmatpush.msra.mxu0 %v417
    %1167 = vmatmul.f32.gmra.mxu0 %v1149
    %v1168 = vpop.f32.mrf.mxu0
    %v1169 = vadd.f32 0.0, %v1168
    %1170 = vdwg.mxu0
    %v1172 = vrot.slane %v1169, 4
    %v1174 = vadd.f32 %v457, %v1172
    %v1175 = vxor.u32 %v1174, 2147483648
    %v1176 = vmul.f32 %v1175, 1.442695
    %v1177 = vpow.pop %v1176
    %v1178 = vadd.f32 %v1177, 1.0
    %v1179 = vrcp.pop %v1178
    %v1180 = vmul.f32 %v1178, %v1179
    %v1181 = vsub.f32 1.0, %v1180
    %v1182 = vmul.f32 %v1179, %v1181
    %v1183 = vadd.f32 %v1179, %v1182
    %vm1184 = vweird.f32 %v1178
    %vm1185 = vweird.f32 %v1179
    %vm1186 = vmor %vm1184, %vm1185
    %v1187 = vsel %vm1186, %v1179, %v1183
    %v1188 = vand.u32 2147483647, %v1178
    %vm1189 = vcmp.eq.f32.partialorder %v1188, 8.507059e+37
    %v1190 = vand.u32 %v1178, 2147483648
    %v1191 = vor.u32 1.1754944e-38, %v1190
    %v1192 = vsel %vm1189, %v1191, %v1187
    %v1193 = vmul.f32 1.0, %v1192
    %v1194 = vtanh.pop %v1174
    %v1196 = vrot.slane %v1138, 6
    %v1198 = vmul.f32 %v1193, %v1196
    %1200 = vrot.lane.b32.xlu0 %v1194, 96
    %v1201 = vpop.permute.xlu0 %1200
    %v1203 = vmul.f32 %v1193, %v1201
    %1205 = vrot.lane.b32.xlu0 %v1203, 16
    %v1206 = vpop.permute.xlu0 %1205
    %v1208 = vadd.f32 %v1198, %v1206
    %v1209 = vtanh.pop %v1208
    %1211 = vrot.lane.b32.xlu0 %v1209, 32
    %v1212 = vpop.permute.xlu0 %1211
    %v1214 = vmul.f32 %v1193, %v1212
    %v1216 = vrot.slane %v1214, 4
    %1217 = vrot.lane.b32.xlu0 %v1216, 80
    %v1218 = vpop.permute.xlu0 %1217
    %v1219 = vsel %vm462, %v1218, 0
    %1221 = vmatpush.msra.mxu0 0.0
    %1222 = vmatpush.msra.mxu0 0.0
    %1223 = vmatpush.msra.mxu0 0.0
    %1224 = vmatpush.msra.mxu0 0.0
    %1225 = vmatpush.msra.mxu0 0.0
    %1226 = vmatpush.msra.mxu0 0.0
    %1227 = vmatpush.msra.mxu0 0.0
    %1228 = vmatpush.msra.mxu0 0.0
    %1229 = vmatpush.msra.mxu0 0.0
    %1230 = vmatpush.msra.mxu0 0.0
    %1231 = vmatpush.msra.mxu0 0.0
    %1232 = vmatpush.msra.mxu0 0.0
    %1233 = vmatpush.msra.mxu0 0.0
    %1234 = vmatpush.msra.mxu0 0.0
    %1235 = vmatpush.msra.mxu0 %v418
    %1236 = vmatpush.msra.mxu0 %v417
    %1237 = vmatmul.f32.gmra.mxu0 %v1219
    %v1238 = vpop.f32.mrf.mxu0
    %v1239 = vadd.f32 0.0, %v1238
    %1240 = vdwg.mxu0
    %v1242 = vrot.slane %v1239, 2
    %v1244 = vadd.f32 %v457, %v1242
    %v1245 = vxor.u32 %v1244, 2147483648
    %v1246 = vmul.f32 %v1245, 1.442695
    %v1247 = vpow.pop %v1246
    %v1248 = vadd.f32 %v1247, 1.0
    %v1249 = vrcp.pop %v1248
    %v1250 = vmul.f32 %v1248, %v1249
    %v1251 = vsub.f32 1.0, %v1250
    %v1252 = vmul.f32 %v1249, %v1251
    %v1253 = vadd.f32 %v1249, %v1252
    %vm1254 = vweird.f32 %v1248
    %vm1255 = vweird.f32 %v1249
    %vm1256 = vmor %vm1254, %vm1255
    %v1257 = vsel %vm1256, %v1249, %v1253
    %v1258 = vand.u32 2147483647, %v1248
    %vm1259 = vcmp.eq.f32.partialorder %v1258, 8.507059e+37
    %v1260 = vand.u32 %v1248, 2147483648
    %v1261 = vor.u32 1.1754944e-38, %v1260
    %v1262 = vsel %vm1259, %v1261, %v1257
    %v1263 = vmul.f32 1.0, %v1262
    %v1264 = vtanh.pop %v1244
    %v1266 = vrot.slane %v1208, 6
    %v1268 = vmul.f32 %v1263, %v1266
    %1270 = vrot.lane.b32.xlu0 %v1264, 96
    %v1271 = vpop.permute.xlu0 %1270
    %v1273 = vmul.f32 %v1263, %v1271
    %1275 = vrot.lane.b32.xlu0 %v1273, 16
    %v1276 = vpop.permute.xlu0 %1275
    %v1278 = vadd.f32 %v1268, %v1276
    %v1279 = vtanh.pop %v1278
    %1281 = vrot.lane.b32.xlu0 %v1279, 32
    %v1282 = vpop.permute.xlu0 %1281
    %v1284 = vmul.f32 %v1263, %v1282
    %v1286 = vrot.slane %v1284, 6
    %1287 = vrot.lane.b32.xlu0 %v1286, 80
    %v1288 = vpop.permute.xlu0 %1287
    %v1289 = vsel %vm462, %v1288, 0
    %1291 = vmatpush.msra.mxu0 0.0
    %1292 = vmatpush.msra.mxu0 0.0
    %1293 = vmatpush.msra.mxu0 0.0
    %1294 = vmatpush.msra.mxu0 0.0
    %1295 = vmatpush.msra.mxu0 0.0
    %1296 = vmatpush.msra.mxu0 0.0
    %1297 = vmatpush.msra.mxu0 0.0
    %1298 = vmatpush.msra.mxu0 0.0
    %1299 = vmatpush.msra.mxu0 0.0
    %1300 = vmatpush.msra.mxu0 0.0
    %1301 = vmatpush.msra.mxu0 0.0
    %1302 = vmatpush.msra.mxu0 0.0
    %1303 = vmatpush.msra.mxu0 0.0
    %1304 = vmatpush.msra.mxu0 0.0
    %1305 = vmatpush.msra.mxu0 %v418
    %1306 = vmatpush.msra.mxu0 %v417
    %1307 = vmatmul.f32.gmra.mxu0 %v1289
    %v1308 = vpop.f32.mrf.mxu0
    %v1309 = vadd.f32 0.0, %v1308
    %1310 = vdwg.mxu0
    %v1311 = vadd.f32 %v460, %v1309
    %v1312 = vxor.u32 %v1311, 2147483648
    %v1313 = vmul.f32 %v1312, 1.442695
    %v1314 = vpow.pop %v1313
    %v1315 = vadd.f32 %v1314, 1.0
    %v1316 = vrcp.pop %v1315
    %v1317 = vmul.f32 %v1315, %v1316
    %v1318 = vsub.f32 1.0, %v1317
    %v1319 = vmul.f32 %v1316, %v1318
    %v1320 = vadd.f32 %v1316, %v1319
    %vm1321 = vweird.f32 %v1315
    %vm1322 = vweird.f32 %v1316
    %vm1323 = vmor %vm1321, %vm1322
    %v1324 = vsel %vm1323, %v1316, %v1320
    %v1325 = vand.u32 2147483647, %v1315
    %vm1326 = vcmp.eq.f32.partialorder %v1325, 8.507059e+37
    %v1327 = vand.u32 %v1315, 2147483648
    %v1328 = vor.u32 1.1754944e-38, %v1327
    %v1329 = vsel %vm1326, %v1328, %v1324
    %v1330 = vmul.f32 1.0, %v1329
    %v1331 = vtanh.pop %v1311
    %v1333 = vrot.slane %v1278, 6
    %v1335 = vmul.f32 %v1330, %v1333
    %1337 = vrot.lane.b32.xlu0 %v1331, 96
    %v1338 = vpop.permute.xlu0 %1337
    %v1340 = vmul.f32 %v1330, %v1338
    %1342 = vrot.lane.b32.xlu0 %v1340, 16
    %v1343 = vpop.permute.xlu0 %1342
    %v1345 = vadd.f32 %v1335, %v1343
    %v1346 = vtanh.pop %v1345
    %1348 = vrot.lane.b32.xlu0 %v1346, 32
    %v1349 = vpop.permute.xlu0 %1348
    %v1351 = vmul.f32 %v1330, %v1349
    %1353 = vrot.lane.b32.xlu0 %v1351, 80
    %v1354 = vpop.permute.xlu0 %1353
    %v1355 = vsel %vm462, %v1354, 0
    %1357 = vmatpush.msra.mxu0 0.0
    %1358 = vmatpush.msra.mxu0 0.0
    %1359 = vmatpush.msra.mxu0 0.0
    %1360 = vmatpush.msra.mxu0 0.0
    %1361 = vmatpush.msra.mxu0 0.0
    %1362 = vmatpush.msra.mxu0 0.0
    %1363 = vmatpush.msra.mxu0 0.0
    %1364 = vmatpush.msra.mxu0 0.0
    %1365 = vmatpush.msra.mxu0 0.0
    %1366 = vmatpush.msra.mxu0 0.0
    %1367 = vmatpush.msra.mxu0 0.0
    %1368 = vmatpush.msra.mxu0 0.0
    %1369 = vmatpush.msra.mxu0 0.0
    %1370 = vmatpush.msra.mxu0 0.0
    %1371 = vmatpush.msra.mxu0 %v418
    %1372 = vmatpush.msra.mxu0 %v417
    %1373 = vmatmul.f32.gmra.mxu0 %v1355
    %v1374 = vpop.f32.mrf.mxu0
    %v1375 = vadd.f32 0.0, %v1374
    %1376 = vdwg.mxu0
    %v1378 = vrot.slane %v1375, 6
    %v1380 = vadd.f32 %v460, %v1378
    %v1381 = vxor.u32 %v1380, 2147483648
    %v1382 = vmul.f32 %v1381, 1.442695
    %v1383 = vpow.pop %v1382
    %v1384 = vadd.f32 %v1383, 1.0
    %v1385 = vrcp.pop %v1384
    %v1386 = vmul.f32 %v1384, %v1385
    %v1387 = vsub.f32 1.0, %v1386
    %v1388 = vmul.f32 %v1385, %v1387
    %v1389 = vadd.f32 %v1385, %v1388
    %vm1390 = vweird.f32 %v1384
    %vm1391 = vweird.f32 %v1385
    %vm1392 = vmor %vm1390, %vm1391
    %v1393 = vsel %vm1392, %v1385, %v1389
    %v1394 = vand.u32 2147483647, %v1384
    %vm1395 = vcmp.eq.f32.partialorder %v1394, 8.507059e+37
    %v1396 = vand.u32 %v1384, 2147483648
    %v1397 = vor.u32 1.1754944e-38, %v1396
    %v1398 = vsel %vm1395, %v1397, %v1393
    %v1399 = vmul.f32 1.0, %v1398
    %v1400 = vtanh.pop %v1380
    %v1402 = vrot.slane %v1345, 6
    %v1404 = vmul.f32 %v1399, %v1402
    %1406 = vrot.lane.b32.xlu0 %v1400, 96
    %v1407 = vpop.permute.xlu0 %1406
    %v1409 = vmul.f32 %v1399, %v1407
    %1411 = vrot.lane.b32.xlu0 %v1409, 16
    %v1412 = vpop.permute.xlu0 %1411
    %v1414 = vadd.f32 %v1404, %v1412
    %v1415 = vtanh.pop %v1414
    %1417 = vrot.lane.b32.xlu0 %v1415, 32
    %v1418 = vpop.permute.xlu0 %1417
    %v1420 = vmul.f32 %v1399, %v1418
    %v1421 = vld [vmem:[%s0 + $0x20] sm:$0xff]
    %v1422 = vld [vmem:[%s0 + $0x28] sm:$0x3]
    %v1423 = vld [vmem:[#allocation2 + $0x60] sm:$0x7f]
    %v1424 = vld [vmem:[#allocation2 + $0x68] sm:$0xff]
    %v1425 = vld [vmem:[#allocation2 + $0x70] sm:$0xff]
    %v1426 = vld [vmem:[#allocation2 + $0x78] sm:$0x1]
    %v1427 = vperm.slane %v1426, 0
    %vm1428 = vcmask 56320
    %v1430 = vsel %vm1428, %v1421, 0
    %v1433 = vsel %vm1428, %v1422, 0
    %vm1435 = vcmask 1046528
    %v1437 = vsel %vm1435, %v1423, 0
    %1439 = vmatpush.msra.mxu0 0.0
    %1440 = vmatpush.msra.mxu0 0.0
    %1441 = vmatpush.msra.mxu0 0.0
    %1442 = vmatpush.msra.mxu0 0.0
    %1443 = vmatpush.msra.mxu0 0.0
    %1444 = vmatpush.msra.mxu0 0.0
    %1445 = vmatpush.msra.mxu0 0.0
    %1446 = vmatpush.msra.mxu0 0.0
    %1447 = vmatpush.msra.mxu0 0.0
    %1448 = vmatpush.msra.mxu0 0.0
    %1449 = vmatpush.msra.mxu0 0.0
    %1450 = vmatpush.msra.mxu0 0.0
    %1451 = vmatpush.msra.mxu0 0.0
    %1452 = vmatpush.msra.mxu0 0.0
    %1453 = vmatpush.msra.mxu0 0.0
    %1454 = vmatpush.msra.mxu0 %v1437
    %1455 = vmatmul.f32.gmra.mxu0 %v1430
    %v1456 = vpop.f32.mrf.mxu0
    %v1457 = vadd.f32 %v1427, %v1456
    %1458 = vmatmul.f32.gmra.mxu0 %v1433
    %v1459 = vpop.f32.mrf.mxu0
    %v1460 = vadd.f32 %v1427, %v1459
    %1461 = vdwg.mxu0
    %1462 = vmatpush.msra.mxu0 0.0
    %1463 = vmatpush.msra.mxu0 0.0
    %1464 = vmatpush.msra.mxu0 0.0
    %1465 = vmatpush.msra.mxu0 0.0
    %1466 = vmatpush.msra.mxu0 0.0
    %1467 = vmatpush.msra.mxu0 0.0
    %1468 = vmatpush.msra.mxu0 0.0
    %1469 = vmatpush.msra.mxu0 0.0
    %1470 = vmatpush.msra.mxu0 0.0
    %1471 = vmatpush.msra.mxu0 0.0
    %1472 = vmatpush.msra.mxu0 0.0
    %1473 = vmatpush.msra.mxu0 0.0
    %1474 = vmatpush.msra.mxu0 0.0
    %1475 = vmatpush.msra.mxu0 0.0
    %1476 = vmatpush.msra.mxu0 %v1425
    %1477 = vmatpush.msra.mxu0 %v1424
    %1478 = vmatmul.f32.gmra.mxu0 %v464
    %v1479 = vpop.f32.mrf.mxu0
    %v1480 = vadd.f32 0.0, %v1479
    %1481 = vdwg.mxu0
    %v1482 = vadd.f32 %v1457, %v1480
    %v1483 = vxor.u32 %v1482, 2147483648
    %v1484 = vmul.f32 %v1483, 1.442695
    %v1485 = vpow.pop %v1484
    %v1486 = vadd.f32 %v1485, 1.0
    %v1487 = vrcp.pop %v1486
    %v1488 = vmul.f32 %v1486, %v1487
    %v1489 = vsub.f32 1.0, %v1488
    %v1490 = vmul.f32 %v1487, %v1489
    %v1491 = vadd.f32 %v1487, %v1490
    %vm1492 = vweird.f32 %v1486
    %vm1493 = vweird.f32 %v1487
    %vm1494 = vmor %vm1492, %vm1493
    %v1495 = vsel %vm1494, %v1487, %v1491
    %v1496 = vand.u32 2147483647, %v1486
    %vm1497 = vcmp.eq.f32.partialorder %v1496, 8.507059e+37
    %v1498 = vand.u32 %v1486, 2147483648
    %v1499 = vor.u32 1.1754944e-38, %v1498
    %v1500 = vsel %vm1497, %v1499, %v1495
    %v1501 = vmul.f32 1.0, %v1500
    %v1502 = vtanh.pop %v1482
    %v1503 = vmul.f32 %v1501, 0.0
    %1505 = vrot.lane.b32.xlu0 %v1502, 96
    %v1506 = vpop.permute.xlu0 %1505
    %v1508 = vmul.f32 %v1501, %v1506
    %1510 = vrot.lane.b32.xlu0 %v1508, 16
    %v1511 = vpop.permute.xlu0 %1510
    %v1513 = vadd.f32 %v1503, %v1511
    %v1514 = vtanh.pop %v1513
    %1516 = vrot.lane.b32.xlu0 %v1514, 32
    %v1517 = vpop.permute.xlu0 %1516
    %v1519 = vmul.f32 %v1501, %v1517
    %1521 = vrot.lane.b32.xlu0 %v1519, 80
    %v1522 = vpop.permute.xlu0 %1521
    %v1523 = vsel %vm462, %v1522, 0
    %1525 = vmatpush.msra.mxu0 0.0
    %1526 = vmatpush.msra.mxu0 0.0
    %1527 = vmatpush.msra.mxu0 0.0
    %1528 = vmatpush.msra.mxu0 0.0
    %1529 = vmatpush.msra.mxu0 0.0
    %1530 = vmatpush.msra.mxu0 0.0
    %1531 = vmatpush.msra.mxu0 0.0
    %1532 = vmatpush.msra.mxu0 0.0
    %1533 = vmatpush.msra.mxu0 0.0
    %1534 = vmatpush.msra.mxu0 0.0
    %1535 = vmatpush.msra.mxu0 0.0
    %1536 = vmatpush.msra.mxu0 0.0
    %1537 = vmatpush.msra.mxu0 0.0
    %1538 = vmatpush.msra.mxu0 0.0
    %1539 = vmatpush.msra.mxu0 %v1425
    %1540 = vmatpush.msra.mxu0 %v1424
    %1541 = vmatmul.f32.gmra.mxu0 %v1523
    %v1542 = vpop.f32.mrf.mxu0
    %v1543 = vadd.f32 0.0, %v1542
    %1544 = vdwg.mxu0
    %v1546 = vrot.slane %v1543, 6
    %v1548 = vadd.f32 %v1457, %v1546
    %v1549 = vxor.u32 %v1548, 2147483648
    %v1550 = vmul.f32 %v1549, 1.442695
    %v1551 = vpow.pop %v1550
    %v1552 = vadd.f32 %v1551, 1.0
    %v1553 = vrcp.pop %v1552
    %v1554 = vmul.f32 %v1552, %v1553
    %v1555 = vsub.f32 1.0, %v1554
    %v1556 = vmul.f32 %v1553, %v1555
    %v1557 = vadd.f32 %v1553, %v1556
    %vm1558 = vweird.f32 %v1552
    %vm1559 = vweird.f32 %v1553
    %vm1560 = vmor %vm1558, %vm1559
    %v1561 = vsel %vm1560, %v1553, %v1557
    %v1562 = vand.u32 2147483647, %v1552
    %vm1563 = vcmp.eq.f32.partialorder %v1562, 8.507059e+37
    %v1564 = vand.u32 %v1552, 2147483648
    %v1565 = vor.u32 1.1754944e-38, %v1564
    %v1566 = vsel %vm1563, %v1565, %v1561
    %v1567 = vmul.f32 1.0, %v1566
    %v1568 = vtanh.pop %v1548
    %v1570 = vrot.slane %v1513, 6
    %v1572 = vmul.f32 %v1567, %v1570
    %1574 = vrot.lane.b32.xlu0 %v1568, 96
    %v1575 = vpop.permute.xlu0 %1574
    %v1577 = vmul.f32 %v1567, %v1575
    %1579 = vrot.lane.b32.xlu0 %v1577, 16
    %v1580 = vpop.permute.xlu0 %1579
    %v1582 = vadd.f32 %v1572, %v1580
    %v1583 = vtanh.pop %v1582
    %1585 = vrot.lane.b32.xlu0 %v1583, 32
    %v1586 = vpop.permute.xlu0 %1585
    %v1588 = vmul.f32 %v1567, %v1586
    %v1590 = vrot.slane %v1588, 2
    %1591 = vrot.lane.b32.xlu0 %v1590, 80
    %v1592 = vpop.permute.xlu0 %1591
    %v1593 = vsel %vm462, %v1592, 0
    %1595 = vmatpush.msra.mxu0 0.0
    %1596 = vmatpush.msra.mxu0 0.0
    %1597 = vmatpush.msra.mxu0 0.0
    %1598 = vmatpush.msra.mxu0 0.0
    %1599 = vmatpush.msra.mxu0 0.0
    %1600 = vmatpush.msra.mxu0 0.0
    %1601 = vmatpush.msra.mxu0 0.0
    %1602 = vmatpush.msra.mxu0 0.0
    %1603 = vmatpush.msra.mxu0 0.0
    %1604 = vmatpush.msra.mxu0 0.0
    %1605 = vmatpush.msra.mxu0 0.0
    %1606 = vmatpush.msra.mxu0 0.0
    %1607 = vmatpush.msra.mxu0 0.0
    %1608 = vmatpush.msra.mxu0 0.0
    %1609 = vmatpush.msra.mxu0 %v1425
    %1610 = vmatpush.msra.mxu0 %v1424
    %1611 = vmatmul.f32.gmra.mxu0 %v1593
    %v1612 = vpop.f32.mrf.mxu0
    %v1613 = vadd.f32 0.0, %v1612
    %1614 = vdwg.mxu0
    %v1616 = vrot.slane %v1613, 4
    %v1618 = vadd.f32 %v1457, %v1616
    %v1619 = vxor.u32 %v1618, 2147483648
    %v1620 = vmul.f32 %v1619, 1.442695
    %v1621 = vpow.pop %v1620
    %v1622 = vadd.f32 %v1621, 1.0
    %v1623 = vrcp.pop %v1622
    %v1624 = vmul.f32 %v1622, %v1623
    %v1625 = vsub.f32 1.0, %v1624
    %v1626 = vmul.f32 %v1623, %v1625
    %v1627 = vadd.f32 %v1623, %v1626
    %vm1628 = vweird.f32 %v1622
    %vm1629 = vweird.f32 %v1623
    %vm1630 = vmor %vm1628, %vm1629
    %v1631 = vsel %vm1630, %v1623, %v1627
    %v1632 = vand.u32 2147483647, %v1622
    %vm1633 = vcmp.eq.f32.partialorder %v1632, 8.507059e+37
    %v1634 = vand.u32 %v1622, 2147483648
    %v1635 = vor.u32 1.1754944e-38, %v1634
    %v1636 = vsel %vm1633, %v1635, %v1631
    %v1637 = vmul.f32 1.0, %v1636
    %v1638 = vtanh.pop %v1618
    %v1640 = vrot.slane %v1582, 6
    %v1642 = vmul.f32 %v1637, %v1640
    %1644 = vrot.lane.b32.xlu0 %v1638, 96
    %v1645 = vpop.permute.xlu0 %1644
    %v1647 = vmul.f32 %v1637, %v1645
    %1649 = vrot.lane.b32.xlu0 %v1647, 16
    %v1650 = vpop.permute.xlu0 %1649
    %v1652 = vadd.f32 %v1642, %v1650
    %v1653 = vtanh.pop %v1652
    %1655 = vrot.lane.b32.xlu0 %v1653, 32
    %v1656 = vpop.permute.xlu0 %1655
    %v1658 = vmul.f32 %v1637, %v1656
    %v1660 = vrot.slane %v1658, 4
    %1661 = vrot.lane.b32.xlu0 %v1660, 80
    %v1662 = vpop.permute.xlu0 %1661
    %v1663 = vsel %vm462, %v1662, 0
    %1665 = vmatpush.msra.mxu0 0.0
    %1666 = vmatpush.msra.mxu0 0.0
    %1667 = vmatpush.msra.mxu0 0.0
    %1668 = vmatpush.msra.mxu0 0.0
    %1669 = vmatpush.msra.mxu0 0.0
    %1670 = vmatpush.msra.mxu0 0.0
    %1671 = vmatpush.msra.mxu0 0.0
    %1672 = vmatpush.msra.mxu0 0.0
    %1673 = vmatpush.msra.mxu0 0.0
    %1674 = vmatpush.msra.mxu0 0.0
    %1675 = vmatpush.msra.mxu0 0.0
    %1676 = vmatpush.msra.mxu0 0.0
    %1677 = vmatpush.msra.mxu0 0.0
    %1678 = vmatpush.msra.mxu0 0.0
    %1679 = vmatpush.msra.mxu0 %v1425
    %1680 = vmatpush.msra.mxu0 %v1424
    %1681 = vmatmul.f32.gmra.mxu0 %v1663
    %v1682 = vpop.f32.mrf.mxu0
    %v1683 = vadd.f32 0.0, %v1682
    %1684 = vdwg.mxu0
    %v1686 = vrot.slane %v1683, 2
    %v1688 = vadd.f32 %v1457, %v1686
    %v1689 = vxor.u32 %v1688, 2147483648
    %v1690 = vmul.f32 %v1689, 1.442695
    %v1691 = vpow.pop %v1690
    %v1692 = vadd.f32 %v1691, 1.0
    %v1693 = vrcp.pop %v1692
    %v1694 = vmul.f32 %v1692, %v1693
    %v1695 = vsub.f32 1.0, %v1694
    %v1696 = vmul.f32 %v1693, %v1695
    %v1697 = vadd.f32 %v1693, %v1696
    %vm1698 = vweird.f32 %v1692
    %vm1699 = vweird.f32 %v1693
    %vm1700 = vmor %vm1698, %vm1699
    %v1701 = vsel %vm1700, %v1693, %v1697
    %v1702 = vand.u32 2147483647, %v1692
    %vm1703 = vcmp.eq.f32.partialorder %v1702, 8.507059e+37
    %v1704 = vand.u32 %v1692, 2147483648
    %v1705 = vor.u32 1.1754944e-38, %v1704
    %v1706 = vsel %vm1703, %v1705, %v1701
    %v1707 = vmul.f32 1.0, %v1706
    %v1708 = vtanh.pop %v1688
    %v1710 = vrot.slane %v1652, 6
    %v1712 = vmul.f32 %v1707, %v1710
    %1714 = vrot.lane.b32.xlu0 %v1708, 96
    %v1715 = vpop.permute.xlu0 %1714
    %v1717 = vmul.f32 %v1707, %v1715
    %1719 = vrot.lane.b32.xlu0 %v1717, 16
    %v1720 = vpop.permute.xlu0 %1719
    %v1722 = vadd.f32 %v1712, %v1720
    %v1723 = vtanh.pop %v1722
    %1725 = vrot.lane.b32.xlu0 %v1723, 32
    %v1726 = vpop.permute.xlu0 %1725
    %v1728 = vmul.f32 %v1707, %v1726
    %v1730 = vrot.slane %v1728, 6
    %1731 = vrot.lane.b32.xlu0 %v1730, 80
    %v1732 = vpop.permute.xlu0 %1731
    %v1733 = vsel %vm462, %v1732, 0
    %1735 = vmatpush.msra.mxu0 0.0
    %1736 = vmatpush.msra.mxu0 0.0
    %1737 = vmatpush.msra.mxu0 0.0
    %1738 = vmatpush.msra.mxu0 0.0
    %1739 = vmatpush.msra.mxu0 0.0
    %1740 = vmatpush.msra.mxu0 0.0
    %1741 = vmatpush.msra.mxu0 0.0
    %1742 = vmatpush.msra.mxu0 0.0
    %1743 = vmatpush.msra.mxu0 0.0
    %1744 = vmatpush.msra.mxu0 0.0
    %1745 = vmatpush.msra.mxu0 0.0
    %1746 = vmatpush.msra.mxu0 0.0
    %1747 = vmatpush.msra.mxu0 0.0
    %1748 = vmatpush.msra.mxu0 0.0
    %1749 = vmatpush.msra.mxu0 %v1425
    %1750 = vmatpush.msra.mxu0 %v1424
    %1751 = vmatmul.f32.gmra.mxu0 %v1733
    %v1752 = vpop.f32.mrf.mxu0
    %v1753 = vadd.f32 0.0, %v1752
    %1754 = vdwg.mxu0
    %v1755 = vadd.f32 %v1460, %v1753
    %v1756 = vxor.u32 %v1755, 2147483648
    %v1757 = vmul.f32 %v1756, 1.442695
    %v1758 = vpow.pop %v1757
    %v1759 = vadd.f32 %v1758, 1.0
    %v1760 = vrcp.pop %v1759
    %v1761 = vmul.f32 %v1759, %v1760
    %v1762 = vsub.f32 1.0, %v1761
    %v1763 = vmul.f32 %v1760, %v1762
    %v1764 = vadd.f32 %v1760, %v1763
    %vm1765 = vweird.f32 %v1759
    %vm1766 = vweird.f32 %v1760
    %vm1767 = vmor %vm1765, %vm1766
    %v1768 = vsel %vm1767, %v1760, %v1764
    %v1769 = vand.u32 2147483647, %v1759
    %vm1770 = vcmp.eq.f32.partialorder %v1769, 8.507059e+37
    %v1771 = vand.u32 %v1759, 2147483648
    %v1772 = vor.u32 1.1754944e-38, %v1771
    %v1773 = vsel %vm1770, %v1772, %v1768
    %v1774 = vmul.f32 1.0, %v1773
    %v1775 = vtanh.pop %v1755
    %v1777 = vrot.slane %v1722, 6
    %v1779 = vmul.f32 %v1774, %v1777
    %1781 = vrot.lane.b32.xlu0 %v1775, 96
    %v1782 = vpop.permute.xlu0 %1781
    %v1784 = vmul.f32 %v1774, %v1782
    %1786 = vrot.lane.b32.xlu0 %v1784, 16
    %v1787 = vpop.permute.xlu0 %1786
    %v1789 = vadd.f32 %v1779, %v1787
    %v1790 = vtanh.pop %v1789
    %1792 = vrot.lane.b32.xlu0 %v1790, 32
    %v1793 = vpop.permute.xlu0 %1792
    %v1795 = vmul.f32 %v1774, %v1793
    %v1796 = vld [vmem:[#allocation2 + $0x80] sm:$0xff]
    %v1797 = vld [vmem:[#allocation2 + $0x88] sm:$0xff]
    %v1798 = vld [vmem:[#allocation2 + $0x90] sm:$0xff]
    %v1799 = vld [vmem:[#allocation2 + $0x98] sm:$0xff]
    %v1801 = vrot.slane %v1414, 2
    %1802 = vrot.lane.b32.xlu0 %v1801, 112
    %v1803 = vpop.permute.xlu0 %1802
    %v1804 = vsel %vm462, %v1803, 0
    %1806 = vmatpush.msra.mxu0 0.0
    %1807 = vmatpush.msra.mxu0 0.0
    %1808 = vmatpush.msra.mxu0 0.0
    %1809 = vmatpush.msra.mxu0 0.0
    %1810 = vmatpush.msra.mxu0 0.0
    %1811 = vmatpush.msra.mxu0 0.0
    %1812 = vmatpush.msra.mxu0 0.0
    %1813 = vmatpush.msra.mxu0 0.0
    %1814 = vmatpush.msra.mxu0 0.0
    %1815 = vmatpush.msra.mxu0 0.0
    %1816 = vmatpush.msra.mxu0 0.0
    %1817 = vmatpush.msra.mxu0 0.0
    %1818 = vmatpush.msra.mxu0 0.0
    %1819 = vmatpush.msra.mxu0 0.0
    %1820 = vmatpush.msra.mxu0 %v1799
    %1821 = vmatpush.msra.mxu0 %v1798
    %1822 = vmatmul.f32.gmra.mxu0 %v1804
    %v1823 = vpop.f32.mrf.mxu0
    %v1824 = vadd.f32 0.0, %v1823
    %1825 = vdwg.mxu0
    %v1827 = vrot.slane %v1420, 2
    %1828 = vrot.lane.b32.xlu0 %v1827, 80
    %v1829 = vpop.permute.xlu0 %1828
    %v1830 = vsel %vm462, %v1829, 0
    %1832 = vmatpush.msra.mxu0 0.0
    %1833 = vmatpush.msra.mxu0 0.0
    %1834 = vmatpush.msra.mxu0 0.0
    %1835 = vmatpush.msra.mxu0 0.0
    %1836 = vmatpush.msra.mxu0 0.0
    %1837 = vmatpush.msra.mxu0 0.0
    %1838 = vmatpush.msra.mxu0 0.0
    %1839 = vmatpush.msra.mxu0 0.0
    %1840 = vmatpush.msra.mxu0 0.0
    %1841 = vmatpush.msra.mxu0 0.0
    %1842 = vmatpush.msra.mxu0 0.0
    %1843 = vmatpush.msra.mxu0 0.0
    %1844 = vmatpush.msra.mxu0 0.0
    %1845 = vmatpush.msra.mxu0 0.0
    %1846 = vmatpush.msra.mxu0 %v1797
    %1847 = vmatpush.msra.mxu0 %v1796
    %1848 = vmatmul.f32.gmra.mxu0 %v1830
    %v1849 = vpop.f32.mrf.mxu0
    %v1850 = vadd.f32 %v1824, %v1849
    %1851 = vdwg.mxu0
    %v1852 = vld [vmem:[#allocation2 + $0xa0] sm:$0xff]
    %v1853 = vld [vmem:[#allocation2 + $0xa8] sm:$0xff]
    %1855 = vrot.lane.b32.xlu0 %v1795, 80
    %v1856 = vpop.permute.xlu0 %1855
    %v1857 = vsel %vm462, %v1856, 0
    %1859 = vmatpush.msra.mxu0 0.0
    %1860 = vmatpush.msra.mxu0 0.0
    %1861 = vmatpush.msra.mxu0 0.0
    %1862 = vmatpush.msra.mxu0 0.0
    %1863 = vmatpush.msra.mxu0 0.0
    %1864 = vmatpush.msra.mxu0 0.0
    %1865 = vmatpush.msra.mxu0 0.0
    %1866 = vmatpush.msra.mxu0 0.0
    %1867 = vmatpush.msra.mxu0 0.0
    %1868 = vmatpush.msra.mxu0 0.0
    %1869 = vmatpush.msra.mxu0 0.0
    %1870 = vmatpush.msra.mxu0 0.0
    %1871 = vmatpush.msra.mxu0 0.0
    %1872 = vmatpush.msra.mxu0 0.0
    %1873 = vmatpush.msra.mxu0 %v1853
    %1874 = vmatpush.msra.mxu0 %v1852
    %1875 = vmatmul.f32.gmra.mxu0 %v1857
    %v1876 = vpop.f32.mrf.mxu0
    %v1877 = vadd.f32 0.0, %v1876
    %1878 = vdwg.mxu0
    %v1879 = vadd.f32 %v1850, %v1877
    %v1880 = vld [vmem:[#allocation2 + $0xb0] sm:$0xff]
    %v1881 = vld [vmem:[#allocation2 + $0xb8] sm:$0xff]
    %1883 = vrot.lane.b32.xlu0 %v1789, 112
    %v1884 = vpop.permute.xlu0 %1883
    %v1885 = vsel %vm462, %v1884, 0
    %1887 = vmatpush.msra.mxu0 0.0
    %1888 = vmatpush.msra.mxu0 0.0
    %1889 = vmatpush.msra.mxu0 0.0
    %1890 = vmatpush.msra.mxu0 0.0
    %1891 = vmatpush.msra.mxu0 0.0
    %1892 = vmatpush.msra.mxu0 0.0
    %1893 = vmatpush.msra.mxu0 0.0
    %1894 = vmatpush.msra.mxu0 0.0
    %1895 = vmatpush.msra.mxu0 0.0
    %1896 = vmatpush.msra.mxu0 0.0
    %1897 = vmatpush.msra.mxu0 0.0
    %1898 = vmatpush.msra.mxu0 0.0
    %1899 = vmatpush.msra.mxu0 0.0
    %1900 = vmatpush.msra.mxu0 0.0
    %1901 = vmatpush.msra.mxu0 %v1881
    %1902 = vmatpush.msra.mxu0 %v1880
    %1903 = vmatmul.f32.gmra.mxu0 %v1885
    %v1904 = vpop.f32.mrf.mxu0
    %v1905 = vadd.f32 0.0, %v1904
    %1906 = vdwg.mxu0
    %v1907 = vadd.f32 %v1879, %v1905
    %v1908 = vld [vmem:[#allocation2 + $0xc0] sm:$0x1]
    %v1909 = vperm.slane %v1908, 0
    %v1910 = vadd.f32 %v1907, %v1909
    %vm1911 = vcmask 9216
    %v1912 = vsel %vm1911, %v1910, -inf
    %1913 = vmax.xlane.f32.xlu0 %v1912
    %v1914 = vpop.xlane.xlu0 %1913
    %v1915 = vsub.f32 %v1910, %v1914
    %v1916 = vmul.f32 %v1915, 1.442695
    %v1917 = vpow.pop %v1916
    %v1918 = vsel %vm1911, %v1917, 0.0
    %1919 = vadd.xlane.f32.xlu0 %v1918
    %v1920 = vpop.xlane.xlu0 %1919
    %v1921 = vlog2.pop %v1920
    %v1922 = vmul.f32 %v1921, 0.6931472
    %v1923 = vsub.f32 %v1915, %v1922
    %1924 = vst.msk [vmem:[#allocation5] sm:$0x3] %vm1911, %v1923
    // Predicated region
    $region14: #{forward.1} parent=1 // pred_check
      _
    $region15: #{forward.1} parent=1 // pred_check_branch
      %1926 = sbr.rel (0) target = $region17
    $region16: #{forward.1} parent=1 // pred_region
      %1928 = vsyncadd [#allocation4], 0
      %s1930 = sshll.u32 [#allocation5], 4
      %s1931 = int_to_ptr.vmem [resolvable:$true] %s1930
      %s1932 = sshll.u32 %s2, 4
      %s1933 = int_to_ptr.hbm [resolvable:$true] %s1932
      %1935 = dma.vmem_to_hbm [thread:$0]  %s1931, 32, %s1933, [#allocation4]
    $region17: #{forward.1} parent=1 // pred_fallthru
      _
    // Predicated region
    $region18: #{forward.1} parent=1 // pred_check
      _
    $region19: #{forward.1} parent=1 // pred_check_branch
      %1937 = sbr.rel (0) target = $region21
    $region20: #{forward.1} parent=1 // pred_region
      %1939 = dma.done [#allocation4], 32
    $region21: #{forward.1} parent=1 // pred_fallthru
      _
    %1940 = vsyncpa [#allocation3], 1
    %1941 = vsyncpa [#allocation4], 1

</llo_original>
